<compile_context>
chip_gen: v7x
topology: tpu7x:2x2x1
jax: 0.10.0
libtpu: 0.0.40
codegen_flags: <defaults>
</compile_context>

<pallas_src>
import jax
import jax.numpy as jnp
import numpy as np
from jax import lax
from jax.experimental import pallas as pl


# ----------------------------------------------------------------------------
# Single fused kernel: input projection + interleaved bi-LSTM + z recurrence.
#   No grid: everything is VMEM resident at these shapes; the T loops are
#   statically unrolled and all recurrent state lives in vregs.
# ----------------------------------------------------------------------------
def _fused_generator_kernel(x_ref, wih_ref, bih_ref, whh_ref, mg_ref, mh_ref,
                            wzx_ref, bzx_ref, wihz_ref, wrec_ref, bhh_ref,
                            z_ref, lg_ref):
    Np, T = z_ref.shape                      # padded rows, time steps
    G8 = wih_ref.shape[1]                    # 8*H (interleaved fwd/bwd gates)
    H = G8 // 8
    ZR = bhh_ref.shape[1]
    f32 = jnp.float32
    bf16 = jnp.bfloat16

    # ---- Prologue (off the serial chain): both directions' input-gate
    #      projections in ONE bf16 MXU matmul; weights / masks hoisted once. --
    gx = jnp.dot(x_ref[...].astype(bf16), wih_ref[...],
                 preferred_element_type=f32) + bih_ref[...]       # (T*Np, 8H)
    w_hh = whh_ref[...]                                           # bf16 (2H, 8H)
    mg = mg_ref[...]                                              # (1, 8H): 1 on fwd cols
    mg_c = 1.0 - mg
    mh = mh_ref[...]                                              # (1, 2H): 1 on fwd half
    mh_c = 1.0 - mh

    # ---- Interleaved fwd/bwd LSTM recurrence (static unroll, state in vregs).
    #      Column layout: [i_f i_b | f_f f_b | g_f g_b | o_f o_b], state layout
    #      [h_fwd | h_bwd]; fwd reads time t, bwd reads time T-1-t (constants).
    h = jnp.zeros((Np, 2 * H), f32)
    c = jnp.zeros((Np, 2 * H), f32)
    h_hist = []
    for t in range(T):
        gx_f = gx[t * Np:(t + 1) * Np, :]                         # time t
        gx_b = gx[(T - 1 - t) * Np:(T - t) * Np, :]               # time T-1-t
        gxt = mg * gx_f + mg_c * gx_b                             # exact 0/1 blend
        gates = gxt + jnp.dot(h.astype(bf16), w_hh,
                              preferred_element_type=f32)         # (Np, 8H)
        ig = jax.nn.sigmoid(gates[:, 0 * H:2 * H])
        fg = jax.nn.sigmoid(gates[:, 2 * H:4 * H])
        gg = jnp.tanh(gates[:, 4 * H:6 * H])
        og = jax.nn.sigmoid(gates[:, 6 * H:8 * H])
        c = fg * c + ig * gg
        h = og * jnp.tanh(c)
        h_hist.append(h)          # fwd half at time t, bwd half at time T-1-t

    # Re-align directions: h_enc(t) = [h_fwd(t) | h_bwd(t)], stacked time-major.
    h_enc = jnp.concatenate(
        [mh * h_hist[t] + mh_c * h_hist[T - 1 - t] for t in range(T)],
        axis=0)                                                   # (T*Np, 2H)

    # ---- Hoisted z projections in ONE matmul: columns [ihc_x | logit_x]. ----
    zx = jnp.dot(h_enc.astype(bf16), wzx_ref[...],
                 preferred_element_type=f32) + bzx_ref[...]       # (T*Np, 3ZR+1)

    wihz = jnp.broadcast_to(wihz_ref[...], (Np, 3 * ZR))
    wrec = wrec_ref[...]                                          # bf16 (2ZR, ZR+1)
    bhh = jnp.broadcast_to(bhh_ref[...], (Np, ZR))

    # ---- Dependent z recurrence (BernoulliGate + RCNNCell), state in vregs. -
    c1 = jnp.zeros((Np, ZR), f32)
    c2 = jnp.zeros((Np, ZR), f32)
    hs = jnp.zeros((Np, ZR), f32)
    z_cols, lg_cols = [], []
    for t in range(T):
        zx_t = zx[t * Np:(t + 1) * Np, :]
        ihc_x = zx_t[:, 0:3 * ZR]                                 # (Np, 3ZR)
        lg_x = zx_t[:, 3 * ZR:3 * ZR + 1]                         # (Np, 1)

        # [u | logit_state] in one MXU op (block-diag RHS) instead of an XLU
        # lane-reduce for c1 . wg_s.
        m = jnp.dot(jnp.concatenate([hs, c1], axis=-1).astype(bf16),
                    wrec, preferred_element_type=f32)             # (Np, ZR+1)
        logit = lg_x + m[:, ZR:ZR + 1]                            # (Np, 1)
        z_t = (logit >= 0.0).astype(f32)
        z_cols.append(z_t)
        lg_cols.append(logit)

        ihc = ihc_x + z_t * wihz                                  # + z_t * W_z
        u = m[:, 0:ZR] + bhh
        lam = jax.nn.sigmoid(ihc[:, 0:ZR] + u)
        c1n = lam * c1 + (1.0 - lam) * ihc[:, ZR:2 * ZR]
        c2n = lam * c2 + (1.0 - lam) * (c1 + ihc[:, 2 * ZR:3 * ZR])
        c1, c2, hs = c1n, c2n, jnp.tanh(c2n)

    # ---- Single writeback per output (no per-step masked stores). ----------
    z_ref[...] = jnp.concatenate(z_cols, axis=-1)                 # (Np, T)
    lg_ref[...] = jnp.concatenate(lg_cols, axis=-1)               # (Np, T)


# ----------------------------------------------------------------------------
# Wrapper: embedding gather, one-time weight re-packing, fused pallas_call.
# ----------------------------------------------------------------------------
def dependent_generator_forward(params, docs, doc_lengths, sent_lengths,
                                num_samples=1):
    del doc_lengths, sent_lengths, num_samples   # see TODO(synk) header notes
    B, S, T = docs.shape
    N = B * S
    Np = ((N + 7) // 8) * 8                      # pad rows to a sublane multiple

    pf, pb, zp = params["lstm_f"], params["lstm_b"], params["z"]
    H = pf["w_hh"].shape[0]
    ZR = zp["whh"].shape[0]

    # Embedding (+ Dropout == identity in eval); time-major flatten + row pad.
    emb = params["emb"][docs]                                     # (B,S,T,E)
    x = jnp.transpose(emb, (2, 0, 1, 3)).reshape(T, N, -1)
    x = jnp.pad(x, ((0, 0), (0, Np - N), (0, 0)))
    x = x.reshape(T * Np, -1)                                     # (T*Np, E)

    # ---- one-time weight re-packing (O(params), off the data path) ---------
    def interleave(wf, wb):   # (...,4H) x2 -> (...,8H) cols [i_f i_b f_f f_b ...]
        parts = []
        for k in range(4):
            parts += [wf[..., k * H:(k + 1) * H], wb[..., k * H:(k + 1) * H]]
        return jnp.concatenate(parts, axis=-1)

    w_ih_mix = interleave(pf["w_ih"], pb["w_ih"]).astype(jnp.bfloat16)  # (E,8H)
    b_ih_mix = interleave(pf["b"], pb["b"])                             # (1,8H)

    w_hh_mix = jnp.zeros((2 * H, 8 * H), jnp.float32)
    for k in range(4):
        w_hh_mix = w_hh_mix.at[0:H, (2 * k) * H:(2 * k + 1) * H].set(
            pf["w_hh"][:, k * H:(k + 1) * H])
        w_hh_mix = w_hh_mix.at[H:2 * H, (2 * k + 1) * H:(2 * k + 2) * H].set(
            pb["w_hh"][:, k * H:(k + 1) * H])
    w_hh_mix = w_hh_mix.astype(jnp.bfloat16)                            # (2H,8H)

    blk = jnp.concatenate([jnp.ones((H,), jnp.float32),
                           jnp.zeros((H,), jnp.float32)])
    maskg = jnp.tile(blk, 4)[None, :]                                   # (1,8H)
    maskh = blk[None, :]                                                # (1,2H)

    w_zx = jnp.concatenate([zp["wih_h"], zp["wg_h"].T],
                           axis=1).astype(jnp.bfloat16)                 # (2H,3ZR+1)
    b_zx = jnp.concatenate([jnp.zeros((1, 3 * ZR), jnp.float32), zp["bg"]],
                           axis=1)                                      # (1,3ZR+1)

    w_rec = jnp.zeros((2 * ZR, ZR + 1), jnp.float32)
    w_rec = w_rec.at[0:ZR, 0:ZR].set(zp["whh"])
    w_rec = w_rec.at[ZR:2 * ZR, ZR:ZR + 1].set(zp["wg_s"].T)
    w_rec = w_rec.astype(jnp.bfloat16)                                  # (2ZR,ZR+1)

    z_pad, lg_pad = pl.pallas_call(
        _fused_generator_kernel,
        out_shape=(jax.ShapeDtypeStruct((Np, T), jnp.float32),
                   jax.ShapeDtypeStruct((Np, T), jnp.float32)),
    )(x, w_ih_mix, b_ih_mix, w_hh_mix, maskg, maskh,
      w_zx, b_zx, zp["wih_z"], w_rec, zp["bhh"])

    z = z_pad[:N].reshape(B, S, T)          # rows ordered b*S + s
    logits = lg_pad[:N].reshape(B, S, T)    # returned for validation only
    return z, logits


# ----------------------------------------------------------------------------
# Pure-JAX reference (lax.scan) mirroring the same bf16-operand / f32-accum
# matmuls, so kernel and reference are compared on identical math.
# ----------------------------------------------------------------------------
def _bdot(a, b):
    return jnp.dot(a.astype(jnp.bfloat16), b.astype(jnp.bfloat16),
                   preferred_element_type=jnp.float32)


def _lstm_ref(x, w_ih, w_hh, b):
    N, H = x.shape[1], w_hh.shape[0]

    def step(carry, x_t):
        h, c = carry
        gates = _bdot(x_t, w_ih) + b[0] + _bdot(h, w_hh)
        i, f, g, o = jnp.split(gates, 4, axis=-1)
        c = jax.nn.sigmoid(f) * c + jax.nn.sigmoid(i) * jnp.tanh(g)
        h = jax.nn.sigmoid(o) * jnp.tanh(c)
        return (h, c), h

    _, hs = lax.scan(step, (jnp.zeros((N, H)), jnp.zeros((N, H))), x)
    return hs


def forward_ref(params, docs):
    B, S, T = docs.shape
    emb = params["emb"][docs]
    x = jnp.transpose(emb, (2, 0, 1, 3)).reshape(T, B * S, -1)
    hf = _lstm_ref(x, **params["lstm_f"])
    hb = jnp.flip(_lstm_ref(jnp.flip(x, 0), **params["lstm_b"]), 0)
    h = jnp.concatenate([hf, hb], -1)
    p = params["z"]
    N, ZR = B * S, p["whh"].shape[0]

    def step(carry, h_t):
        c1, c2, hs = carry
        logit = _bdot(h_t, p["wg_h"].T) + _bdot(c1, p["wg_s"].T) + p["bg"]
        z_t = (logit >= 0.0).astype(jnp.float32)
        ihc = _bdot(h_t, p["wih_h"]) + z_t * p["wih_z"]
        wlx, w1x, w2x = jnp.split(ihc, 3, -1)
        u = _bdot(hs, p["whh"]) + p["bhh"]
        lam = jax.nn.sigmoid(wlx + u)
        c1n = lam * c1 + (1 - lam) * w1x
        c2n = lam * c2 + (1 - lam) * (c1 + w2x)
        return (c1n, c2n, jnp.tanh(c2n)), (z_t, logit)

    init = tuple(jnp.zeros((N, ZR)) for _ in range(3))
    _, (zs, lgs) = lax.scan(step, init, h)
    z = zs.reshape(T, B, S).transpose(1, 2, 0)
    lg = lgs.reshape(T, B, S).transpose(1, 2, 0)
    return z, lg


# ----------------------------------------------------------------------------
# Deterministic parameter init (synthetic weights, not a checkpoint)
# ----------------------------------------------------------------------------
def init_params(key, vocab, E, H, ZR):
    enc = 2 * H
    ks = list(jax.random.split(key, 14))

    def n(k, shape, scale=0.1):
        return (scale * jax.random.normal(k, shape)).astype(jnp.float32)

    def lstm(k1, k2, k3):
        return dict(w_ih=n(k1, (E, 4 * H)), w_hh=n(k2, (H, 4 * H)),
                    b=n(k3, (1, 4 * H)))

    return dict(
        emb=n(ks[0], (vocab, E)),
        lstm_f=lstm(ks[1], ks[2], ks[3]),
        lstm_b=lstm(ks[4], ks[5], ks[6]),
        z=dict(
            wg_h=n(ks[7], (1, enc)),
            wg_s=n(ks[8], (1, ZR)),
            bg=n(ks[9], (1, 1)),
            wih_h=n(ks[10], (enc, 3 * ZR)),
            wih_z=n(ks[11], (1, 3 * ZR)),
            whh=n(ks[12], (ZR, ZR)),
            bhh=n(ks[13], (1, ZR)),
        ),
    )


if __name__ == "__main__":
    B, S, T = 2, 3, 8                 # batch, sentences per doc, words per sentence
    VOCAB, E, H, ZR = 50, 32, 32, 16  # vocab, emb_size, hidden_size, z_rnn_size

    params = init_params(jax.random.PRNGKey(0), VOCAB, E, H, ZR)
    docs = jax.random.randint(jax.random.PRNGKey(1), (B, S, T), 0, VOCAB,
                              dtype=jnp.int32)
    doc_lengths = jnp.full((B,), S, jnp.int32)
    sent_lengths = jnp.full((B, S), T, jnp.int32)

    fwd = jax.jit(dependent_generator_forward)
    z, logits = fwd(params, docs, doc_lengths, sent_lengths)
    z = jax.block_until_ready(z)

    z_ref, lg_ref = forward_ref(params, docs)
    z_np, lg_np = np.asarray(z), np.asarray(logits)
    z_ref_np, lg_ref_np = np.asarray(z_ref), np.asarray(lg_ref)

    # Validate the continuous gate logits with a tolerance band, then require
    # the binary z to agree everywhere the logit is not boundary-adjacent.
    np.testing.assert_allclose(lg_np, lg_ref_np, rtol=3e-3, atol=3e-4)
    decisive = np.abs(lg_ref_np) > 3e-3
    assert np.array_equal(z_np[decisive], z_ref_np[decisive])
    assert z.shape == (B, S, T) and z.dtype == jnp.float32

    print("KERNEL_OK")
</pallas_src>

<mosaic_0001>
module attributes {stable_mosaic.version = 11 : i64} {
  func.func @_fused_generator_kernel(%arg0: memref<64x32xf32, #tpu.memory_space<vmem>>, %arg1: memref<32x256xbf16, #tpu.memory_space<vmem>>, %arg2: memref<1x256xf32, #tpu.memory_space<vmem>>, %arg3: memref<64x256xbf16, #tpu.memory_space<vmem>>, %arg4: memref<1x256xf32, #tpu.memory_space<vmem>>, %arg5: memref<1x64xf32, #tpu.memory_space<vmem>>, %arg6: memref<64x49xbf16, #tpu.memory_space<vmem>>, %arg7: memref<1x49xf32, #tpu.memory_space<vmem>>, %arg8: memref<1x48xf32, #tpu.memory_space<vmem>>, %arg9: memref<32x17xbf16, #tpu.memory_space<vmem>>, %arg10: memref<1x16xf32, #tpu.memory_space<vmem>>, %arg11: memref<8x8xf32, #tpu.memory_space<vmem>>, %arg12: memref<8x8xf32, #tpu.memory_space<vmem>>) attributes {dimension_semantics = [], scalar_prefetch = 0 : i64, scratch_operands = 0 : i64, tpu.core_type = #tpu.core_type<tc>} {
    %c0 = arith.constant 0 : index
    %c0_0 = arith.constant 0 : index
    %0 = vector.load %arg0[%c0, %c0_0] : memref<64x32xf32, #tpu.memory_space<vmem>>, vector<64x32xf32>
    %1 = arith.truncf %0 : vector<64x32xf32> to vector<64x32xbf16>
    %c0_1 = arith.constant 0 : index
    %c0_2 = arith.constant 0 : index
    %2 = vector.load %arg1[%c0_1, %c0_2] : memref<32x256xbf16, #tpu.memory_space<vmem>>, vector<32x256xbf16>
    %cst = arith.constant dense<0.000000e+00> : vector<64x256xf32>
    %3 = tpu.matmul %1, %2, %cst {dimension_numbers = #tpu.dot_dimension_numbers<[1], [0], [0], [1], [0, 0, 1, 1], [], []>} : vector<64x32xbf16>, vector<32x256xbf16>, vector<64x256xf32> -> vector<64x256xf32>
    %c0_3 = arith.constant 0 : index
    %c0_4 = arith.constant 0 : index
    %4 = vector.load %arg2[%c0_3, %c0_4] : memref<1x256xf32, #tpu.memory_space<vmem>>, vector<1x256xf32>
    %5 = vector.broadcast %4 : vector<1x256xf32> to vector<64x256xf32>
    %6 = arith.addf %3, %5 : vector<64x256xf32>
    %c0_5 = arith.constant 0 : index
    %c0_6 = arith.constant 0 : index
    %7 = vector.load %arg3[%c0_5, %c0_6] : memref<64x256xbf16, #tpu.memory_space<vmem>>, vector<64x256xbf16>
    %c0_7 = arith.constant 0 : index
    %c0_8 = arith.constant 0 : index
    %8 = vector.load %arg4[%c0_7, %c0_8] : memref<1x256xf32, #tpu.memory_space<vmem>>, vector<1x256xf32>
    %cst_9 = arith.constant 1.000000e+00 : f32
    %9 = vector.broadcast %cst_9 : f32 to vector<1x256xf32>
    %10 = arith.subf %9, %8 : vector<1x256xf32>
    %c0_10 = arith.constant 0 : index
    %c0_11 = arith.constant 0 : index
    %11 = vector.load %arg5[%c0_10, %c0_11] : memref<1x64xf32, #tpu.memory_space<vmem>>, vector<1x64xf32>
    %cst_12 = arith.constant 1.000000e+00 : f32
    %12 = vector.broadcast %cst_12 : f32 to vector<1x64xf32>
    %13 = arith.subf %12, %11 : vector<1x64xf32>
    %cst_13 = arith.constant 0.000000e+00 : f32
    %14 = vector.broadcast %cst_13 : f32 to vector<8x64xf32>
    %cst_14 = arith.constant 0.000000e+00 : f32
    %15 = vector.broadcast %cst_14 : f32 to vector<8x64xf32>
    %16 = vector.extract_strided_slice %6 {offsets = [0, 0], sizes = [8, 256], strides = [1, 1]} : vector<64x256xf32> to vector<8x256xf32>
    %17 = vector.extract_strided_slice %6 {offsets = [56, 0], sizes = [8, 256], strides = [1, 1]} : vector<64x256xf32> to vector<8x256xf32>
    %18 = vector.broadcast %8 : vector<1x256xf32> to vector<8x256xf32>
    %19 = arith.mulf %18, %16 : vector<8x256xf32>
    %20 = vector.broadcast %10 : vector<1x256xf32> to vector<8x256xf32>
    %21 = arith.mulf %20, %17 : vector<8x256xf32>
    %22 = arith.addf %19, %21 : vector<8x256xf32>
    %23 = arith.truncf %14 : vector<8x64xf32> to vector<8x64xbf16>
    %cst_15 = arith.constant dense<0.000000e+00> : vector<8x256xf32>
    %24 = tpu.matmul %23, %7, %cst_15 {dimension_numbers = #tpu.dot_dimension_numbers<[1], [0], [0], [1], [0, 0, 1, 1], [], []>} : vector<8x64xbf16>, vector<64x256xbf16>, vector<8x256xf32> -> vector<8x256xf32>
    %25 = arith.addf %22, %24 : vector<8x256xf32>
    %26 = vector.extract_strided_slice %25 {offsets = [0, 0], sizes = [8, 64], strides = [1, 1]} : vector<8x256xf32> to vector<8x64xf32>
    %27 = arith.negf %26 : vector<8x64xf32>
    %28 = math.exp %27 : vector<8x64xf32>
    %cst_16 = arith.constant 1.000000e+00 : f32
    %29 = vector.broadcast %cst_16 : f32 to vector<8x64xf32>
    %30 = arith.addf %29, %28 : vector<8x64xf32>
    %31 = arith.divf %29, %30 : vector<8x64xf32>
    %32 = vector.extract_strided_slice %25 {offsets = [0, 64], sizes = [8, 64], strides = [1, 1]} : vector<8x256xf32> to vector<8x64xf32>
    %33 = arith.negf %32 : vector<8x64xf32>
    %34 = math.exp %33 : vector<8x64xf32>
    %cst_17 = arith.constant 1.000000e+00 : f32
    %35 = vector.broadcast %cst_17 : f32 to vector<8x64xf32>
    %36 = arith.addf %35, %34 : vector<8x64xf32>
    %37 = arith.divf %35, %36 : vector<8x64xf32>
    %38 = vector.extract_strided_slice %25 {offsets = [0, 128], sizes = [8, 64], strides = [1, 1]} : vector<8x256xf32> to vector<8x64xf32>
    %39 = math.tanh %38 : vector<8x64xf32>
    %40 = vector.extract_strided_slice %25 {offsets = [0, 192], sizes = [8, 64], strides = [1, 1]} : vector<8x256xf32> to vector<8x64xf32>
    %41 = arith.negf %40 : vector<8x64xf32>
    %42 = math.exp %41 : vector<8x64xf32>
    %cst_18 = arith.constant 1.000000e+00 : f32
    %43 = vector.broadcast %cst_18 : f32 to vector<8x64xf32>
    %44 = arith.addf %43, %42 : vector<8x64xf32>
    %45 = arith.divf %43, %44 : vector<8x64xf32>
    %46 = arith.mulf %37, %15 : vector<8x64xf32>
    %47 = arith.mulf %31, %39 : vector<8x64xf32>
    %48 = arith.addf %46, %47 : vector<8x64xf32>
    %49 = math.tanh %48 : vector<8x64xf32>
    %50 = arith.mulf %45, %49 : vector<8x64xf32>
    %51 = vector.extract_strided_slice %6 {offsets = [8, 0], sizes = [8, 256], strides = [1, 1]} : vector<64x256xf32> to vector<8x256xf32>
    %52 = vector.extract_strided_slice %6 {offsets = [48, 0], sizes = [8, 256], strides = [1, 1]} : vector<64x256xf32> to vector<8x256xf32>
    %53 = vector.broadcast %8 : vector<1x256xf32> to vector<8x256xf32>
    %54 = arith.mulf %53, %51 : vector<8x256xf32>
    %55 = vector.broadcast %10 : vector<1x256xf32> to vector<8x256xf32>
    %56 = arith.mulf %55, %52 : vector<8x256xf32>
    %57 = arith.addf %54, %56 : vector<8x256xf32>
    %58 = arith.truncf %50 : vector<8x64xf32> to vector<8x64xbf16>
    %cst_19 = arith.constant dense<0.000000e+00> : vector<8x256xf32>
    %59 = tpu.matmul %58, %7, %cst_19 {dimension_numbers = #tpu.dot_dimension_numbers<[1], [0], [0], [1], [0, 0, 1, 1], [], []>} : vector<8x64xbf16>, vector<64x256xbf16>, vector<8x256xf32> -> vector<8x256xf32>
    %60 = arith.addf %57, %59 : vector<8x256xf32>
    %61 = vector.extract_strided_slice %60 {offsets = [0, 0], sizes = [8, 64], strides = [1, 1]} : vector<8x256xf32> to vector<8x64xf32>
    %62 = arith.negf %61 : vector<8x64xf32>
    %63 = math.exp %62 : vector<8x64xf32>
    %cst_20 = arith.constant 1.000000e+00 : f32
    %64 = vector.broadcast %cst_20 : f32 to vector<8x64xf32>
    %65 = arith.addf %64, %63 : vector<8x64xf32>
    %66 = arith.divf %64, %65 : vector<8x64xf32>
    %67 = vector.extract_strided_slice %60 {offsets = [0, 64], sizes = [8, 64], strides = [1, 1]} : vector<8x256xf32> to vector<8x64xf32>
    %68 = arith.negf %67 : vector<8x64xf32>
    %69 = math.exp %68 : vector<8x64xf32>
    %cst_21 = arith.constant 1.000000e+00 : f32
    %70 = vector.broadcast %cst_21 : f32 to vector<8x64xf32>
    %71 = arith.addf %70, %69 : vector<8x64xf32>
    %72 = arith.divf %70, %71 : vector<8x64xf32>
    %73 = vector.extract_strided_slice %60 {offsets = [0, 128], sizes = [8, 64], strides = [1, 1]} : vector<8x256xf32> to vector<8x64xf32>
    %74 = math.tanh %73 : vector<8x64xf32>
    %75 = vector.extract_strided_slice %60 {offsets = [0, 192], sizes = [8, 64], strides = [1, 1]} : vector<8x256xf32> to vector<8x64xf32>
    %76 = arith.negf %75 : vector<8x64xf32>
    %77 = math.exp %76 : vector<8x64xf32>
    %cst_22 = arith.constant 1.000000e+00 : f32
    %78 = vector.broadcast %cst_22 : f32 to vector<8x64xf32>
    %79 = arith.addf %78, %77 : vector<8x64xf32>
    %80 = arith.divf %78, %79 : vector<8x64xf32>
    %81 = arith.mulf %72, %48 : vector<8x64xf32>
    %82 = arith.mulf %66, %74 : vector<8x64xf32>
    %83 = arith.addf %81, %82 : vector<8x64xf32>
    %84 = math.tanh %83 : vector<8x64xf32>
    %85 = arith.mulf %80, %84 : vector<8x64xf32>
    %86 = vector.extract_strided_slice %6 {offsets = [16, 0], sizes = [8, 256], strides = [1, 1]} : vector<64x256xf32> to vector<8x256xf32>
    %87 = vector.extract_strided_slice %6 {offsets = [40, 0], sizes = [8, 256], strides = [1, 1]} : vector<64x256xf32> to vector<8x256xf32>
    %88 = vector.broadcast %8 : vector<1x256xf32> to vector<8x256xf32>
    %89 = arith.mulf %88, %86 : vector<8x256xf32>
    %90 = vector.broadcast %10 : vector<1x256xf32> to vector<8x256xf32>
    %91 = arith.mulf %90, %87 : vector<8x256xf32>
    %92 = arith.addf %89, %91 : vector<8x256xf32>
    %93 = arith.truncf %85 : vector<8x64xf32> to vector<8x64xbf16>
    %cst_23 = arith.constant dense<0.000000e+00> : vector<8x256xf32>
    %94 = tpu.matmul %93, %7, %cst_23 {dimension_numbers = #tpu.dot_dimension_numbers<[1], [0], [0], [1], [0, 0, 1, 1], [], []>} : vector<8x64xbf16>, vector<64x256xbf16>, vector<8x256xf32> -> vector<8x256xf32>
    %95 = arith.addf %92, %94 : vector<8x256xf32>
    %96 = vector.extract_strided_slice %95 {offsets = [0, 0], sizes = [8, 64], strides = [1, 1]} : vector<8x256xf32> to vector<8x64xf32>
    %97 = arith.negf %96 : vector<8x64xf32>
    %98 = math.exp %97 : vector<8x64xf32>
    %cst_24 = arith.constant 1.000000e+00 : f32
    %99 = vector.broadcast %cst_24 : f32 to vector<8x64xf32>
    %100 = arith.addf %99, %98 : vector<8x64xf32>
    %101 = arith.divf %99, %100 : vector<8x64xf32>
    %102 = vector.extract_strided_slice %95 {offsets = [0, 64], sizes = [8, 64], strides = [1, 1]} : vector<8x256xf32> to vector<8x64xf32>
    %103 = arith.negf %102 : vector<8x64xf32>
    %104 = math.exp %103 : vector<8x64xf32>
    %cst_25 = arith.constant 1.000000e+00 : f32
    %105 = vector.broadcast %cst_25 : f32 to vector<8x64xf32>
    %106 = arith.addf %105, %104 : vector<8x64xf32>
    %107 = arith.divf %105, %106 : vector<8x64xf32>
    %108 = vector.extract_strided_slice %95 {offsets = [0, 128], sizes = [8, 64], strides = [1, 1]} : vector<8x256xf32> to vector<8x64xf32>
    %109 = math.tanh %108 : vector<8x64xf32>
    %110 = vector.extract_strided_slice %95 {offsets = [0, 192], sizes = [8, 64], strides = [1, 1]} : vector<8x256xf32> to vector<8x64xf32>
    %111 = arith.negf %110 : vector<8x64xf32>
    %112 = math.exp %111 : vector<8x64xf32>
    %cst_26 = arith.constant 1.000000e+00 : f32
    %113 = vector.broadcast %cst_26 : f32 to vector<8x64xf32>
    %114 = arith.addf %113, %112 : vector<8x64xf32>
    %115 = arith.divf %113, %114 : vector<8x64xf32>
    %116 = arith.mulf %107, %83 : vector<8x64xf32>
    %117 = arith.mulf %101, %109 : vector<8x64xf32>
    %118 = arith.addf %116, %117 : vector<8x64xf32>
    %119 = math.tanh %118 : vector<8x64xf32>
    %120 = arith.mulf %115, %119 : vector<8x64xf32>
    %121 = vector.extract_strided_slice %6 {offsets = [24, 0], sizes = [8, 256], strides = [1, 1]} : vector<64x256xf32> to vector<8x256xf32>
    %122 = vector.extract_strided_slice %6 {offsets = [32, 0], sizes = [8, 256], strides = [1, 1]} : vector<64x256xf32> to vector<8x256xf32>
    %123 = vector.broadcast %8 : vector<1x256xf32> to vector<8x256xf32>
    %124 = arith.mulf %123, %121 : vector<8x256xf32>
    %125 = vector.broadcast %10 : vector<1x256xf32> to vector<8x256xf32>
    %126 = arith.mulf %125, %122 : vector<8x256xf32>
    %127 = arith.addf %124, %126 : vector<8x256xf32>
    %128 = arith.truncf %120 : vector<8x64xf32> to vector<8x64xbf16>
    %cst_27 = arith.constant dense<0.000000e+00> : vector<8x256xf32>
    %129 = tpu.matmul %128, %7, %cst_27 {dimension_numbers = #tpu.dot_dimension_numbers<[1], [0], [0], [1], [0, 0, 1, 1], [], []>} : vector<8x64xbf16>, vector<64x256xbf16>, vector<8x256xf32> -> vector<8x256xf32>
    %130 = arith.addf %127, %129 : vector<8x256xf32>
    %131 = vector.extract_strided_slice %130 {offsets = [0, 0], sizes = [8, 64], strides = [1, 1]} : vector<8x256xf32> to vector<8x64xf32>
    %132 = arith.negf %131 : vector<8x64xf32>
    %133 = math.exp %132 : vector<8x64xf32>
    %cst_28 = arith.constant 1.000000e+00 : f32
    %134 = vector.broadcast %cst_28 : f32 to vector<8x64xf32>
    %135 = arith.addf %134, %133 : vector<8x64xf32>
    %136 = arith.divf %134, %135 : vector<8x64xf32>
    %137 = vector.extract_strided_slice %130 {offsets = [0, 64], sizes = [8, 64], strides = [1, 1]} : vector<8x256xf32> to vector<8x64xf32>
    %138 = arith.negf %137 : vector<8x64xf32>
    %139 = math.exp %138 : vector<8x64xf32>
    %cst_29 = arith.constant 1.000000e+00 : f32
    %140 = vector.broadcast %cst_29 : f32 to vector<8x64xf32>
    %141 = arith.addf %140, %139 : vector<8x64xf32>
    %142 = arith.divf %140, %141 : vector<8x64xf32>
    %143 = vector.extract_strided_slice %130 {offsets = [0, 128], sizes = [8, 64], strides = [1, 1]} : vector<8x256xf32> to vector<8x64xf32>
    %144 = math.tanh %143 : vector<8x64xf32>
    %145 = vector.extract_strided_slice %130 {offsets = [0, 192], sizes = [8, 64], strides = [1, 1]} : vector<8x256xf32> to vector<8x64xf32>
    %146 = arith.negf %145 : vector<8x64xf32>
    %147 = math.exp %146 : vector<8x64xf32>
    %cst_30 = arith.constant 1.000000e+00 : f32
    %148 = vector.broadcast %cst_30 : f32 to vector<8x64xf32>
    %149 = arith.addf %148, %147 : vector<8x64xf32>
    %150 = arith.divf %148, %149 : vector<8x64xf32>
    %151 = arith.mulf %142, %118 : vector<8x64xf32>
    %152 = arith.mulf %136, %144 : vector<8x64xf32>
    %153 = arith.addf %151, %152 : vector<8x64xf32>
    %154 = math.tanh %153 : vector<8x64xf32>
    %155 = arith.mulf %150, %154 : vector<8x64xf32>
    %156 = vector.extract_strided_slice %6 {offsets = [32, 0], sizes = [8, 256], strides = [1, 1]} : vector<64x256xf32> to vector<8x256xf32>
    %157 = vector.extract_strided_slice %6 {offsets = [24, 0], sizes = [8, 256], strides = [1, 1]} : vector<64x256xf32> to vector<8x256xf32>
    %158 = vector.broadcast %8 : vector<1x256xf32> to vector<8x256xf32>
    %159 = arith.mulf %158, %156 : vector<8x256xf32>
    %160 = vector.broadcast %10 : vector<1x256xf32> to vector<8x256xf32>
    %161 = arith.mulf %160, %157 : vector<8x256xf32>
    %162 = arith.addf %159, %161 : vector<8x256xf32>
    %163 = arith.truncf %155 : vector<8x64xf32> to vector<8x64xbf16>
    %cst_31 = arith.constant dense<0.000000e+00> : vector<8x256xf32>
    %164 = tpu.matmul %163, %7, %cst_31 {dimension_numbers = #tpu.dot_dimension_numbers<[1], [0], [0], [1], [0, 0, 1, 1], [], []>} : vector<8x64xbf16>, vector<64x256xbf16>, vector<8x256xf32> -> vector<8x256xf32>
    %165 = arith.addf %162, %164 : vector<8x256xf32>
    %166 = vector.extract_strided_slice %165 {offsets = [0, 0], sizes = [8, 64], strides = [1, 1]} : vector<8x256xf32> to vector<8x64xf32>
    %167 = arith.negf %166 : vector<8x64xf32>
    %168 = math.exp %167 : vector<8x64xf32>
    %cst_32 = arith.constant 1.000000e+00 : f32
    %169 = vector.broadcast %cst_32 : f32 to vector<8x64xf32>
    %170 = arith.addf %169, %168 : vector<8x64xf32>
    %171 = arith.divf %169, %170 : vector<8x64xf32>
    %172 = vector.extract_strided_slice %165 {offsets = [0, 64], sizes = [8, 64], strides = [1, 1]} : vector<8x256xf32> to vector<8x64xf32>
    %173 = arith.negf %172 : vector<8x64xf32>
    %174 = math.exp %173 : vector<8x64xf32>
    %cst_33 = arith.constant 1.000000e+00 : f32
    %175 = vector.broadcast %cst_33 : f32 to vector<8x64xf32>
    %176 = arith.addf %175, %174 : vector<8x64xf32>
    %177 = arith.divf %175, %176 : vector<8x64xf32>
    %178 = vector.extract_strided_slice %165 {offsets = [0, 128], sizes = [8, 64], strides = [1, 1]} : vector<8x256xf32> to vector<8x64xf32>
    %179 = math.tanh %178 : vector<8x64xf32>
    %180 = vector.extract_strided_slice %165 {offsets = [0, 192], sizes = [8, 64], strides = [1, 1]} : vector<8x256xf32> to vector<8x64xf32>
    %181 = arith.negf %180 : vector<8x64xf32>
    %182 = math.exp %181 : vector<8x64xf32>
    %cst_34 = arith.constant 1.000000e+00 : f32
    %183 = vector.broadcast %cst_34 : f32 to vector<8x64xf32>
    %184 = arith.addf %183, %182 : vector<8x64xf32>
    %185 = arith.divf %183, %184 : vector<8x64xf32>
    %186 = arith.mulf %177, %153 : vector<8x64xf32>
    %187 = arith.mulf %171, %179 : vector<8x64xf32>
    %188 = arith.addf %186, %187 : vector<8x64xf32>
    %189 = math.tanh %188 : vector<8x64xf32>
    %190 = arith.mulf %185, %189 : vector<8x64xf32>
    %191 = vector.extract_strided_slice %6 {offsets = [40, 0], sizes = [8, 256], strides = [1, 1]} : vector<64x256xf32> to vector<8x256xf32>
    %192 = vector.extract_strided_slice %6 {offsets = [16, 0], sizes = [8, 256], strides = [1, 1]} : vector<64x256xf32> to vector<8x256xf32>
    %193 = vector.broadcast %8 : vector<1x256xf32> to vector<8x256xf32>
    %194 = arith.mulf %193, %191 : vector<8x256xf32>
    %195 = vector.broadcast %10 : vector<1x256xf32> to vector<8x256xf32>
    %196 = arith.mulf %195, %192 : vector<8x256xf32>
    %197 = arith.addf %194, %196 : vector<8x256xf32>
    %198 = arith.truncf %190 : vector<8x64xf32> to vector<8x64xbf16>
    %cst_35 = arith.constant dense<0.000000e+00> : vector<8x256xf32>
    %199 = tpu.matmul %198, %7, %cst_35 {dimension_numbers = #tpu.dot_dimension_numbers<[1], [0], [0], [1], [0, 0, 1, 1], [], []>} : vector<8x64xbf16>, vector<64x256xbf16>, vector<8x256xf32> -> vector<8x256xf32>
    %200 = arith.addf %197, %199 : vector<8x256xf32>
    %201 = vector.extract_strided_slice %200 {offsets = [0, 0], sizes = [8, 64], strides = [1, 1]} : vector<8x256xf32> to vector<8x64xf32>
    %202 = arith.negf %201 : vector<8x64xf32>
    %203 = math.exp %202 : vector<8x64xf32>
    %cst_36 = arith.constant 1.000000e+00 : f32
    %204 = vector.broadcast %cst_36 : f32 to vector<8x64xf32>
    %205 = arith.addf %204, %203 : vector<8x64xf32>
    %206 = arith.divf %204, %205 : vector<8x64xf32>
    %207 = vector.extract_strided_slice %200 {offsets = [0, 64], sizes = [8, 64], strides = [1, 1]} : vector<8x256xf32> to vector<8x64xf32>
    %208 = arith.negf %207 : vector<8x64xf32>
    %209 = math.exp %208 : vector<8x64xf32>
    %cst_37 = arith.constant 1.000000e+00 : f32
    %210 = vector.broadcast %cst_37 : f32 to vector<8x64xf32>
    %211 = arith.addf %210, %209 : vector<8x64xf32>
    %212 = arith.divf %210, %211 : vector<8x64xf32>
    %213 = vector.extract_strided_slice %200 {offsets = [0, 128], sizes = [8, 64], strides = [1, 1]} : vector<8x256xf32> to vector<8x64xf32>
    %214 = math.tanh %213 : vector<8x64xf32>
    %215 = vector.extract_strided_slice %200 {offsets = [0, 192], sizes = [8, 64], strides = [1, 1]} : vector<8x256xf32> to vector<8x64xf32>
    %216 = arith.negf %215 : vector<8x64xf32>
    %217 = math.exp %216 : vector<8x64xf32>
    %cst_38 = arith.constant 1.000000e+00 : f32
    %218 = vector.broadcast %cst_38 : f32 to vector<8x64xf32>
    %219 = arith.addf %218, %217 : vector<8x64xf32>
    %220 = arith.divf %218, %219 : vector<8x64xf32>
    %221 = arith.mulf %212, %188 : vector<8x64xf32>
    %222 = arith.mulf %206, %214 : vector<8x64xf32>
    %223 = arith.addf %221, %222 : vector<8x64xf32>
    %224 = math.tanh %223 : vector<8x64xf32>
    %225 = arith.mulf %220, %224 : vector<8x64xf32>
    %226 = vector.extract_strided_slice %6 {offsets = [48, 0], sizes = [8, 256], strides = [1, 1]} : vector<64x256xf32> to vector<8x256xf32>
    %227 = vector.extract_strided_slice %6 {offsets = [8, 0], sizes = [8, 256], strides = [1, 1]} : vector<64x256xf32> to vector<8x256xf32>
    %228 = vector.broadcast %8 : vector<1x256xf32> to vector<8x256xf32>
    %229 = arith.mulf %228, %226 : vector<8x256xf32>
    %230 = vector.broadcast %10 : vector<1x256xf32> to vector<8x256xf32>
    %231 = arith.mulf %230, %227 : vector<8x256xf32>
    %232 = arith.addf %229, %231 : vector<8x256xf32>
    %233 = arith.truncf %225 : vector<8x64xf32> to vector<8x64xbf16>
    %cst_39 = arith.constant dense<0.000000e+00> : vector<8x256xf32>
    %234 = tpu.matmul %233, %7, %cst_39 {dimension_numbers = #tpu.dot_dimension_numbers<[1], [0], [0], [1], [0, 0, 1, 1], [], []>} : vector<8x64xbf16>, vector<64x256xbf16>, vector<8x256xf32> -> vector<8x256xf32>
    %235 = arith.addf %232, %234 : vector<8x256xf32>
    %236 = vector.extract_strided_slice %235 {offsets = [0, 0], sizes = [8, 64], strides = [1, 1]} : vector<8x256xf32> to vector<8x64xf32>
    %237 = arith.negf %236 : vector<8x64xf32>
    %238 = math.exp %237 : vector<8x64xf32>
    %cst_40 = arith.constant 1.000000e+00 : f32
    %239 = vector.broadcast %cst_40 : f32 to vector<8x64xf32>
    %240 = arith.addf %239, %238 : vector<8x64xf32>
    %241 = arith.divf %239, %240 : vector<8x64xf32>
    %242 = vector.extract_strided_slice %235 {offsets = [0, 64], sizes = [8, 64], strides = [1, 1]} : vector<8x256xf32> to vector<8x64xf32>
    %243 = arith.negf %242 : vector<8x64xf32>
    %244 = math.exp %243 : vector<8x64xf32>
    %cst_41 = arith.constant 1.000000e+00 : f32
    %245 = vector.broadcast %cst_41 : f32 to vector<8x64xf32>
    %246 = arith.addf %245, %244 : vector<8x64xf32>
    %247 = arith.divf %245, %246 : vector<8x64xf32>
    %248 = vector.extract_strided_slice %235 {offsets = [0, 128], sizes = [8, 64], strides = [1, 1]} : vector<8x256xf32> to vector<8x64xf32>
    %249 = math.tanh %248 : vector<8x64xf32>
    %250 = vector.extract_strided_slice %235 {offsets = [0, 192], sizes = [8, 64], strides = [1, 1]} : vector<8x256xf32> to vector<8x64xf32>
    %251 = arith.negf %250 : vector<8x64xf32>
    %252 = math.exp %251 : vector<8x64xf32>
    %cst_42 = arith.constant 1.000000e+00 : f32
    %253 = vector.broadcast %cst_42 : f32 to vector<8x64xf32>
    %254 = arith.addf %253, %252 : vector<8x64xf32>
    %255 = arith.divf %253, %254 : vector<8x64xf32>
    %256 = arith.mulf %247, %223 : vector<8x64xf32>
    %257 = arith.mulf %241, %249 : vector<8x64xf32>
    %258 = arith.addf %256, %257 : vector<8x64xf32>
    %259 = math.tanh %258 : vector<8x64xf32>
    %260 = arith.mulf %255, %259 : vector<8x64xf32>
    %261 = vector.extract_strided_slice %6 {offsets = [56, 0], sizes = [8, 256], strides = [1, 1]} : vector<64x256xf32> to vector<8x256xf32>
    %262 = vector.extract_strided_slice %6 {offsets = [0, 0], sizes = [8, 256], strides = [1, 1]} : vector<64x256xf32> to vector<8x256xf32>
    %263 = vector.broadcast %8 : vector<1x256xf32> to vector<8x256xf32>
    %264 = arith.mulf %263, %261 : vector<8x256xf32>
    %265 = vector.broadcast %10 : vector<1x256xf32> to vector<8x256xf32>
    %266 = arith.mulf %265, %262 : vector<8x256xf32>
    %267 = arith.addf %264, %266 : vector<8x256xf32>
    %268 = arith.truncf %260 : vector<8x64xf32> to vector<8x64xbf16>
    %cst_43 = arith.constant dense<0.000000e+00> : vector<8x256xf32>
    %269 = tpu.matmul %268, %7, %cst_43 {dimension_numbers = #tpu.dot_dimension_numbers<[1], [0], [0], [1], [0, 0, 1, 1], [], []>} : vector<8x64xbf16>, vector<64x256xbf16>, vector<8x256xf32> -> vector<8x256xf32>
    %270 = arith.addf %267, %269 : vector<8x256xf32>
    %271 = vector.extract_strided_slice %270 {offsets = [0, 0], sizes = [8, 64], strides = [1, 1]} : vector<8x256xf32> to vector<8x64xf32>
    %272 = arith.negf %271 : vector<8x64xf32>
    %273 = math.exp %272 : vector<8x64xf32>
    %cst_44 = arith.constant 1.000000e+00 : f32
    %274 = vector.broadcast %cst_44 : f32 to vector<8x64xf32>
    %275 = arith.addf %274, %273 : vector<8x64xf32>
    %276 = arith.divf %274, %275 : vector<8x64xf32>
    %277 = vector.extract_strided_slice %270 {offsets = [0, 64], sizes = [8, 64], strides = [1, 1]} : vector<8x256xf32> to vector<8x64xf32>
    %278 = arith.negf %277 : vector<8x64xf32>
    %279 = math.exp %278 : vector<8x64xf32>
    %cst_45 = arith.constant 1.000000e+00 : f32
    %280 = vector.broadcast %cst_45 : f32 to vector<8x64xf32>
    %281 = arith.addf %280, %279 : vector<8x64xf32>
    %282 = arith.divf %280, %281 : vector<8x64xf32>
    %283 = vector.extract_strided_slice %270 {offsets = [0, 128], sizes = [8, 64], strides = [1, 1]} : vector<8x256xf32> to vector<8x64xf32>
    %284 = math.tanh %283 : vector<8x64xf32>
    %285 = vector.extract_strided_slice %270 {offsets = [0, 192], sizes = [8, 64], strides = [1, 1]} : vector<8x256xf32> to vector<8x64xf32>
    %286 = arith.negf %285 : vector<8x64xf32>
    %287 = math.exp %286 : vector<8x64xf32>
    %cst_46 = arith.constant 1.000000e+00 : f32
    %288 = vector.broadcast %cst_46 : f32 to vector<8x64xf32>
    %289 = arith.addf %288, %287 : vector<8x64xf32>
    %290 = arith.divf %288, %289 : vector<8x64xf32>
    %291 = arith.mulf %282, %258 : vector<8x64xf32>
    %292 = arith.mulf %276, %284 : vector<8x64xf32>
    %293 = arith.addf %291, %292 : vector<8x64xf32>
    %294 = math.tanh %293 : vector<8x64xf32>
    %295 = arith.mulf %290, %294 : vector<8x64xf32>
    %296 = vector.broadcast %11 : vector<1x64xf32> to vector<8x64xf32>
    %297 = arith.mulf %296, %50 : vector<8x64xf32>
    %298 = vector.broadcast %13 : vector<1x64xf32> to vector<8x64xf32>
    %299 = arith.mulf %298, %295 : vector<8x64xf32>
    %300 = arith.addf %297, %299 : vector<8x64xf32>
    %301 = vector.broadcast %11 : vector<1x64xf32> to vector<8x64xf32>
    %302 = arith.mulf %301, %85 : vector<8x64xf32>
    %303 = vector.broadcast %13 : vector<1x64xf32> to vector<8x64xf32>
    %304 = arith.mulf %303, %260 : vector<8x64xf32>
    %305 = arith.addf %302, %304 : vector<8x64xf32>
    %306 = vector.broadcast %11 : vector<1x64xf32> to vector<8x64xf32>
    %307 = arith.mulf %306, %120 : vector<8x64xf32>
    %308 = vector.broadcast %13 : vector<1x64xf32> to vector<8x64xf32>
    %309 = arith.mulf %308, %225 : vector<8x64xf32>
    %310 = arith.addf %307, %309 : vector<8x64xf32>
    %311 = vector.broadcast %11 : vector<1x64xf32> to vector<8x64xf32>
    %312 = arith.mulf %311, %155 : vector<8x64xf32>
    %313 = vector.broadcast %13 : vector<1x64xf32> to vector<8x64xf32>
    %314 = arith.mulf %313, %190 : vector<8x64xf32>
    %315 = arith.addf %312, %314 : vector<8x64xf32>
    %316 = vector.broadcast %11 : vector<1x64xf32> to vector<8x64xf32>
    %317 = arith.mulf %316, %190 : vector<8x64xf32>
    %318 = vector.broadcast %13 : vector<1x64xf32> to vector<8x64xf32>
    %319 = arith.mulf %318, %155 : vector<8x64xf32>
    %320 = arith.addf %317, %319 : vector<8x64xf32>
    %321 = vector.broadcast %11 : vector<1x64xf32> to vector<8x64xf32>
    %322 = arith.mulf %321, %225 : vector<8x64xf32>
    %323 = vector.broadcast %13 : vector<1x64xf32> to vector<8x64xf32>
    %324 = arith.mulf %323, %120 : vector<8x64xf32>
    %325 = arith.addf %322, %324 : vector<8x64xf32>
    %326 = vector.broadcast %11 : vector<1x64xf32> to vector<8x64xf32>
    %327 = arith.mulf %326, %260 : vector<8x64xf32>
    %328 = vector.broadcast %13 : vector<1x64xf32> to vector<8x64xf32>
    %329 = arith.mulf %328, %85 : vector<8x64xf32>
    %330 = arith.addf %327, %329 : vector<8x64xf32>
    %331 = vector.broadcast %11 : vector<1x64xf32> to vector<8x64xf32>
    %332 = arith.mulf %331, %295 : vector<8x64xf32>
    %333 = vector.broadcast %13 : vector<1x64xf32> to vector<8x64xf32>
    %334 = arith.mulf %333, %50 : vector<8x64xf32>
    %335 = arith.addf %332, %334 : vector<8x64xf32>
    %336 = tpu.concatenate %300, %305, %310, %315, %320, %325, %330, %335 in 0 : vector<8x64xf32>, vector<8x64xf32>, vector<8x64xf32>, vector<8x64xf32>, vector<8x64xf32>, vector<8x64xf32>, vector<8x64xf32>, vector<8x64xf32> -> vector<64x64xf32>
    %337 = arith.truncf %336 : vector<64x64xf32> to vector<64x64xbf16>
    %c0_47 = arith.constant 0 : index
    %c0_48 = arith.constant 0 : index
    %338 = vector.load %arg6[%c0_47, %c0_48] : memref<64x49xbf16, #tpu.memory_space<vmem>>, vector<64x49xbf16>
    %cst_49 = arith.constant dense<0.000000e+00> : vector<64x49xf32>
    %339 = tpu.matmul %337, %338, %cst_49 {dimension_numbers = #tpu.dot_dimension_numbers<[1], [0], [0], [1], [0, 0, 1, 1], [], []>} : vector<64x64xbf16>, vector<64x49xbf16>, vector<64x49xf32> -> vector<64x49xf32>
    %c0_50 = arith.constant 0 : index
    %c0_51 = arith.constant 0 : index
    %340 = vector.load %arg7[%c0_50, %c0_51] : memref<1x49xf32, #tpu.memory_space<vmem>>, vector<1x49xf32>
    %341 = vector.broadcast %340 : vector<1x49xf32> to vector<64x49xf32>
    %342 = arith.addf %339, %341 : vector<64x49xf32>
    %c0_52 = arith.constant 0 : index
    %c0_53 = arith.constant 0 : index
    %343 = vector.load %arg8[%c0_52, %c0_53] : memref<1x48xf32, #tpu.memory_space<vmem>>, vector<1x48xf32>
    %344 = vector.shape_cast %343 : vector<1x48xf32> to vector<1x48xf32>
    %345 = vector.broadcast %344 : vector<1x48xf32> to vector<8x48xf32>
    %c0_54 = arith.constant 0 : index
    %c0_55 = arith.constant 0 : index
    %346 = vector.load %arg9[%c0_54, %c0_55] : memref<32x17xbf16, #tpu.memory_space<vmem>>, vector<32x17xbf16>
    %c0_56 = arith.constant 0 : index
    %c0_57 = arith.constant 0 : index
    %347 = vector.load %arg10[%c0_56, %c0_57] : memref<1x16xf32, #tpu.memory_space<vmem>>, vector<1x16xf32>
    %348 = vector.shape_cast %347 : vector<1x16xf32> to vector<1x16xf32>
    %349 = vector.broadcast %348 : vector<1x16xf32> to vector<8x16xf32>
    %cst_58 = arith.constant 0.000000e+00 : f32
    %350 = vector.broadcast %cst_58 : f32 to vector<8x16xf32>
    %cst_59 = arith.constant 0.000000e+00 : f32
    %351 = vector.broadcast %cst_59 : f32 to vector<8x16xf32>
    %cst_60 = arith.constant 0.000000e+00 : f32
    %352 = vector.broadcast %cst_60 : f32 to vector<8x16xf32>
    %353 = vector.extract_strided_slice %342 {offsets = [0, 0], sizes = [8, 49], strides = [1, 1]} : vector<64x49xf32> to vector<8x49xf32>
    %354 = vector.extract_strided_slice %353 {offsets = [0, 0], sizes = [8, 48], strides = [1, 1]} : vector<8x49xf32> to vector<8x48xf32>
    %355 = vector.extract_strided_slice %353 {offsets = [0, 48], sizes = [8, 1], strides = [1, 1]} : vector<8x49xf32> to vector<8x1xf32>
    %356 = tpu.concatenate %352, %350 in 1 : vector<8x16xf32>, vector<8x16xf32> -> vector<8x32xf32>
    %357 = arith.truncf %356 : vector<8x32xf32> to vector<8x32xbf16>
    %cst_61 = arith.constant dense<0.000000e+00> : vector<8x17xf32>
    %358 = tpu.matmul %357, %346, %cst_61 {dimension_numbers = #tpu.dot_dimension_numbers<[1], [0], [0], [1], [0, 0, 1, 1], [], []>} : vector<8x32xbf16>, vector<32x17xbf16>, vector<8x17xf32> -> vector<8x17xf32>
    %359 = vector.extract_strided_slice %358 {offsets = [0, 16], sizes = [8, 1], strides = [1, 1]} : vector<8x17xf32> to vector<8x1xf32>
    %360 = arith.addf %355, %359 : vector<8x1xf32>
    %cst_62 = arith.constant 0.000000e+00 : f32
    %361 = vector.broadcast %cst_62 : f32 to vector<8x1xf32>
    %362 = arith.cmpf oge, %360, %361 : vector<8x1xf32>
    %363 = arith.extui %362 : vector<8x1xi1> to vector<8x1xi32>
    %364 = arith.sitofp %363 : vector<8x1xi32> to vector<8x1xf32>
    %365 = vector.broadcast %364 : vector<8x1xf32> to vector<8x48xf32>
    %366 = arith.mulf %365, %345 : vector<8x48xf32>
    %367 = arith.addf %354, %366 : vector<8x48xf32>
    %368 = vector.extract_strided_slice %358 {offsets = [0, 0], sizes = [8, 16], strides = [1, 1]} : vector<8x17xf32> to vector<8x16xf32>
    %369 = arith.addf %368, %349 : vector<8x16xf32>
    %370 = vector.extract_strided_slice %367 {offsets = [0, 0], sizes = [8, 16], strides = [1, 1]} : vector<8x48xf32> to vector<8x16xf32>
    %371 = arith.addf %370, %369 : vector<8x16xf32>
    %372 = arith.negf %371 : vector<8x16xf32>
    %373 = math.exp %372 : vector<8x16xf32>
    %cst_63 = arith.constant 1.000000e+00 : f32
    %374 = vector.broadcast %cst_63 : f32 to vector<8x16xf32>
    %375 = arith.addf %374, %373 : vector<8x16xf32>
    %376 = arith.divf %374, %375 : vector<8x16xf32>
    %377 = arith.mulf %376, %350 : vector<8x16xf32>
    %cst_64 = arith.constant 1.000000e+00 : f32
    %378 = vector.broadcast %cst_64 : f32 to vector<8x16xf32>
    %379 = arith.subf %378, %376 : vector<8x16xf32>
    %380 = vector.extract_strided_slice %367 {offsets = [0, 16], sizes = [8, 16], strides = [1, 1]} : vector<8x48xf32> to vector<8x16xf32>
    %381 = arith.mulf %379, %380 : vector<8x16xf32>
    %382 = arith.addf %377, %381 : vector<8x16xf32>
    %383 = arith.mulf %376, %351 : vector<8x16xf32>
    %cst_65 = arith.constant 1.000000e+00 : f32
    %384 = vector.broadcast %cst_65 : f32 to vector<8x16xf32>
    %385 = arith.subf %384, %376 : vector<8x16xf32>
    %386 = vector.extract_strided_slice %367 {offsets = [0, 32], sizes = [8, 16], strides = [1, 1]} : vector<8x48xf32> to vector<8x16xf32>
    %387 = arith.addf %350, %386 : vector<8x16xf32>
    %388 = arith.mulf %385, %387 : vector<8x16xf32>
    %389 = arith.addf %383, %388 : vector<8x16xf32>
    %390 = math.tanh %389 : vector<8x16xf32>
    %391 = vector.extract_strided_slice %342 {offsets = [8, 0], sizes = [8, 49], strides = [1, 1]} : vector<64x49xf32> to vector<8x49xf32>
    %392 = vector.extract_strided_slice %391 {offsets = [0, 0], sizes = [8, 48], strides = [1, 1]} : vector<8x49xf32> to vector<8x48xf32>
    %393 = vector.extract_strided_slice %391 {offsets = [0, 48], sizes = [8, 1], strides = [1, 1]} : vector<8x49xf32> to vector<8x1xf32>
    %394 = tpu.concatenate %390, %382 in 1 : vector<8x16xf32>, vector<8x16xf32> -> vector<8x32xf32>
    %395 = arith.truncf %394 : vector<8x32xf32> to vector<8x32xbf16>
    %cst_66 = arith.constant dense<0.000000e+00> : vector<8x17xf32>
    %396 = tpu.matmul %395, %346, %cst_66 {dimension_numbers = #tpu.dot_dimension_numbers<[1], [0], [0], [1], [0, 0, 1, 1], [], []>} : vector<8x32xbf16>, vector<32x17xbf16>, vector<8x17xf32> -> vector<8x17xf32>
    %397 = vector.extract_strided_slice %396 {offsets = [0, 16], sizes = [8, 1], strides = [1, 1]} : vector<8x17xf32> to vector<8x1xf32>
    %398 = arith.addf %393, %397 : vector<8x1xf32>
    %cst_67 = arith.constant 0.000000e+00 : f32
    %399 = vector.broadcast %cst_67 : f32 to vector<8x1xf32>
    %400 = arith.cmpf oge, %398, %399 : vector<8x1xf32>
    %401 = arith.extui %400 : vector<8x1xi1> to vector<8x1xi32>
    %402 = arith.sitofp %401 : vector<8x1xi32> to vector<8x1xf32>
    %403 = vector.broadcast %402 : vector<8x1xf32> to vector<8x48xf32>
    %404 = arith.mulf %403, %345 : vector<8x48xf32>
    %405 = arith.addf %392, %404 : vector<8x48xf32>
    %406 = vector.extract_strided_slice %396 {offsets = [0, 0], sizes = [8, 16], strides = [1, 1]} : vector<8x17xf32> to vector<8x16xf32>
    %407 = arith.addf %406, %349 : vector<8x16xf32>
    %408 = vector.extract_strided_slice %405 {offsets = [0, 0], sizes = [8, 16], strides = [1, 1]} : vector<8x48xf32> to vector<8x16xf32>
    %409 = arith.addf %408, %407 : vector<8x16xf32>
    %410 = arith.negf %409 : vector<8x16xf32>
    %411 = math.exp %410 : vector<8x16xf32>
    %cst_68 = arith.constant 1.000000e+00 : f32
    %412 = vector.broadcast %cst_68 : f32 to vector<8x16xf32>
    %413 = arith.addf %412, %411 : vector<8x16xf32>
    %414 = arith.divf %412, %413 : vector<8x16xf32>
    %415 = arith.mulf %414, %382 : vector<8x16xf32>
    %cst_69 = arith.constant 1.000000e+00 : f32
    %416 = vector.broadcast %cst_69 : f32 to vector<8x16xf32>
    %417 = arith.subf %416, %414 : vector<8x16xf32>
    %418 = vector.extract_strided_slice %405 {offsets = [0, 16], sizes = [8, 16], strides = [1, 1]} : vector<8x48xf32> to vector<8x16xf32>
    %419 = arith.mulf %417, %418 : vector<8x16xf32>
    %420 = arith.addf %415, %419 : vector<8x16xf32>
    %421 = arith.mulf %414, %389 : vector<8x16xf32>
    %cst_70 = arith.constant 1.000000e+00 : f32
    %422 = vector.broadcast %cst_70 : f32 to vector<8x16xf32>
    %423 = arith.subf %422, %414 : vector<8x16xf32>
    %424 = vector.extract_strided_slice %405 {offsets = [0, 32], sizes = [8, 16], strides = [1, 1]} : vector<8x48xf32> to vector<8x16xf32>
    %425 = arith.addf %382, %424 : vector<8x16xf32>
    %426 = arith.mulf %423, %425 : vector<8x16xf32>
    %427 = arith.addf %421, %426 : vector<8x16xf32>
    %428 = math.tanh %427 : vector<8x16xf32>
    %429 = vector.extract_strided_slice %342 {offsets = [16, 0], sizes = [8, 49], strides = [1, 1]} : vector<64x49xf32> to vector<8x49xf32>
    %430 = vector.extract_strided_slice %429 {offsets = [0, 0], sizes = [8, 48], strides = [1, 1]} : vector<8x49xf32> to vector<8x48xf32>
    %431 = vector.extract_strided_slice %429 {offsets = [0, 48], sizes = [8, 1], strides = [1, 1]} : vector<8x49xf32> to vector<8x1xf32>
    %432 = tpu.concatenate %428, %420 in 1 : vector<8x16xf32>, vector<8x16xf32> -> vector<8x32xf32>
    %433 = arith.truncf %432 : vector<8x32xf32> to vector<8x32xbf16>
    %cst_71 = arith.constant dense<0.000000e+00> : vector<8x17xf32>
    %434 = tpu.matmul %433, %346, %cst_71 {dimension_numbers = #tpu.dot_dimension_numbers<[1], [0], [0], [1], [0, 0, 1, 1], [], []>} : vector<8x32xbf16>, vector<32x17xbf16>, vector<8x17xf32> -> vector<8x17xf32>
    %435 = vector.extract_strided_slice %434 {offsets = [0, 16], sizes = [8, 1], strides = [1, 1]} : vector<8x17xf32> to vector<8x1xf32>
    %436 = arith.addf %431, %435 : vector<8x1xf32>
    %cst_72 = arith.constant 0.000000e+00 : f32
    %437 = vector.broadcast %cst_72 : f32 to vector<8x1xf32>
    %438 = arith.cmpf oge, %436, %437 : vector<8x1xf32>
    %439 = arith.extui %438 : vector<8x1xi1> to vector<8x1xi32>
    %440 = arith.sitofp %439 : vector<8x1xi32> to vector<8x1xf32>
    %441 = vector.broadcast %440 : vector<8x1xf32> to vector<8x48xf32>
    %442 = arith.mulf %441, %345 : vector<8x48xf32>
    %443 = arith.addf %430, %442 : vector<8x48xf32>
    %444 = vector.extract_strided_slice %434 {offsets = [0, 0], sizes = [8, 16], strides = [1, 1]} : vector<8x17xf32> to vector<8x16xf32>
    %445 = arith.addf %444, %349 : vector<8x16xf32>
    %446 = vector.extract_strided_slice %443 {offsets = [0, 0], sizes = [8, 16], strides = [1, 1]} : vector<8x48xf32> to vector<8x16xf32>
    %447 = arith.addf %446, %445 : vector<8x16xf32>
    %448 = arith.negf %447 : vector<8x16xf32>
    %449 = math.exp %448 : vector<8x16xf32>
    %cst_73 = arith.constant 1.000000e+00 : f32
    %450 = vector.broadcast %cst_73 : f32 to vector<8x16xf32>
    %451 = arith.addf %450, %449 : vector<8x16xf32>
    %452 = arith.divf %450, %451 : vector<8x16xf32>
    %453 = arith.mulf %452, %420 : vector<8x16xf32>
    %cst_74 = arith.constant 1.000000e+00 : f32
    %454 = vector.broadcast %cst_74 : f32 to vector<8x16xf32>
    %455 = arith.subf %454, %452 : vector<8x16xf32>
    %456 = vector.extract_strided_slice %443 {offsets = [0, 16], sizes = [8, 16], strides = [1, 1]} : vector<8x48xf32> to vector<8x16xf32>
    %457 = arith.mulf %455, %456 : vector<8x16xf32>
    %458 = arith.addf %453, %457 : vector<8x16xf32>
    %459 = arith.mulf %452, %427 : vector<8x16xf32>
    %cst_75 = arith.constant 1.000000e+00 : f32
    %460 = vector.broadcast %cst_75 : f32 to vector<8x16xf32>
    %461 = arith.subf %460, %452 : vector<8x16xf32>
    %462 = vector.extract_strided_slice %443 {offsets = [0, 32], sizes = [8, 16], strides = [1, 1]} : vector<8x48xf32> to vector<8x16xf32>
    %463 = arith.addf %420, %462 : vector<8x16xf32>
    %464 = arith.mulf %461, %463 : vector<8x16xf32>
    %465 = arith.addf %459, %464 : vector<8x16xf32>
    %466 = math.tanh %465 : vector<8x16xf32>
    %467 = vector.extract_strided_slice %342 {offsets = [24, 0], sizes = [8, 49], strides = [1, 1]} : vector<64x49xf32> to vector<8x49xf32>
    %468 = vector.extract_strided_slice %467 {offsets = [0, 0], sizes = [8, 48], strides = [1, 1]} : vector<8x49xf32> to vector<8x48xf32>
    %469 = vector.extract_strided_slice %467 {offsets = [0, 48], sizes = [8, 1], strides = [1, 1]} : vector<8x49xf32> to vector<8x1xf32>
    %470 = tpu.concatenate %466, %458 in 1 : vector<8x16xf32>, vector<8x16xf32> -> vector<8x32xf32>
    %471 = arith.truncf %470 : vector<8x32xf32> to vector<8x32xbf16>
    %cst_76 = arith.constant dense<0.000000e+00> : vector<8x17xf32>
    %472 = tpu.matmul %471, %346, %cst_76 {dimension_numbers = #tpu.dot_dimension_numbers<[1], [0], [0], [1], [0, 0, 1, 1], [], []>} : vector<8x32xbf16>, vector<32x17xbf16>, vector<8x17xf32> -> vector<8x17xf32>
    %473 = vector.extract_strided_slice %472 {offsets = [0, 16], sizes = [8, 1], strides = [1, 1]} : vector<8x17xf32> to vector<8x1xf32>
    %474 = arith.addf %469, %473 : vector<8x1xf32>
    %cst_77 = arith.constant 0.000000e+00 : f32
    %475 = vector.broadcast %cst_77 : f32 to vector<8x1xf32>
    %476 = arith.cmpf oge, %474, %475 : vector<8x1xf32>
    %477 = arith.extui %476 : vector<8x1xi1> to vector<8x1xi32>
    %478 = arith.sitofp %477 : vector<8x1xi32> to vector<8x1xf32>
    %479 = vector.broadcast %478 : vector<8x1xf32> to vector<8x48xf32>
    %480 = arith.mulf %479, %345 : vector<8x48xf32>
    %481 = arith.addf %468, %480 : vector<8x48xf32>
    %482 = vector.extract_strided_slice %472 {offsets = [0, 0], sizes = [8, 16], strides = [1, 1]} : vector<8x17xf32> to vector<8x16xf32>
    %483 = arith.addf %482, %349 : vector<8x16xf32>
    %484 = vector.extract_strided_slice %481 {offsets = [0, 0], sizes = [8, 16], strides = [1, 1]} : vector<8x48xf32> to vector<8x16xf32>
    %485 = arith.addf %484, %483 : vector<8x16xf32>
    %486 = arith.negf %485 : vector<8x16xf32>
    %487 = math.exp %486 : vector<8x16xf32>
    %cst_78 = arith.constant 1.000000e+00 : f32
    %488 = vector.broadcast %cst_78 : f32 to vector<8x16xf32>
    %489 = arith.addf %488, %487 : vector<8x16xf32>
    %490 = arith.divf %488, %489 : vector<8x16xf32>
    %491 = arith.mulf %490, %458 : vector<8x16xf32>
    %cst_79 = arith.constant 1.000000e+00 : f32
    %492 = vector.broadcast %cst_79 : f32 to vector<8x16xf32>
    %493 = arith.subf %492, %490 : vector<8x16xf32>
    %494 = vector.extract_strided_slice %481 {offsets = [0, 16], sizes = [8, 16], strides = [1, 1]} : vector<8x48xf32> to vector<8x16xf32>
    %495 = arith.mulf %493, %494 : vector<8x16xf32>
    %496 = arith.addf %491, %495 : vector<8x16xf32>
    %497 = arith.mulf %490, %465 : vector<8x16xf32>
    %cst_80 = arith.constant 1.000000e+00 : f32
    %498 = vector.broadcast %cst_80 : f32 to vector<8x16xf32>
    %499 = arith.subf %498, %490 : vector<8x16xf32>
    %500 = vector.extract_strided_slice %481 {offsets = [0, 32], sizes = [8, 16], strides = [1, 1]} : vector<8x48xf32> to vector<8x16xf32>
    %501 = arith.addf %458, %500 : vector<8x16xf32>
    %502 = arith.mulf %499, %501 : vector<8x16xf32>
    %503 = arith.addf %497, %502 : vector<8x16xf32>
    %504 = math.tanh %503 : vector<8x16xf32>
    %505 = vector.extract_strided_slice %342 {offsets = [32, 0], sizes = [8, 49], strides = [1, 1]} : vector<64x49xf32> to vector<8x49xf32>
    %506 = vector.extract_strided_slice %505 {offsets = [0, 0], sizes = [8, 48], strides = [1, 1]} : vector<8x49xf32> to vector<8x48xf32>
    %507 = vector.extract_strided_slice %505 {offsets = [0, 48], sizes = [8, 1], strides = [1, 1]} : vector<8x49xf32> to vector<8x1xf32>
    %508 = tpu.concatenate %504, %496 in 1 : vector<8x16xf32>, vector<8x16xf32> -> vector<8x32xf32>
    %509 = arith.truncf %508 : vector<8x32xf32> to vector<8x32xbf16>
    %cst_81 = arith.constant dense<0.000000e+00> : vector<8x17xf32>
    %510 = tpu.matmul %509, %346, %cst_81 {dimension_numbers = #tpu.dot_dimension_numbers<[1], [0], [0], [1], [0, 0, 1, 1], [], []>} : vector<8x32xbf16>, vector<32x17xbf16>, vector<8x17xf32> -> vector<8x17xf32>
    %511 = vector.extract_strided_slice %510 {offsets = [0, 16], sizes = [8, 1], strides = [1, 1]} : vector<8x17xf32> to vector<8x1xf32>
    %512 = arith.addf %507, %511 : vector<8x1xf32>
    %cst_82 = arith.constant 0.000000e+00 : f32
    %513 = vector.broadcast %cst_82 : f32 to vector<8x1xf32>
    %514 = arith.cmpf oge, %512, %513 : vector<8x1xf32>
    %515 = arith.extui %514 : vector<8x1xi1> to vector<8x1xi32>
    %516 = arith.sitofp %515 : vector<8x1xi32> to vector<8x1xf32>
    %517 = vector.broadcast %516 : vector<8x1xf32> to vector<8x48xf32>
    %518 = arith.mulf %517, %345 : vector<8x48xf32>
    %519 = arith.addf %506, %518 : vector<8x48xf32>
    %520 = vector.extract_strided_slice %510 {offsets = [0, 0], sizes = [8, 16], strides = [1, 1]} : vector<8x17xf32> to vector<8x16xf32>
    %521 = arith.addf %520, %349 : vector<8x16xf32>
    %522 = vector.extract_strided_slice %519 {offsets = [0, 0], sizes = [8, 16], strides = [1, 1]} : vector<8x48xf32> to vector<8x16xf32>
    %523 = arith.addf %522, %521 : vector<8x16xf32>
    %524 = arith.negf %523 : vector<8x16xf32>
    %525 = math.exp %524 : vector<8x16xf32>
    %cst_83 = arith.constant 1.000000e+00 : f32
    %526 = vector.broadcast %cst_83 : f32 to vector<8x16xf32>
    %527 = arith.addf %526, %525 : vector<8x16xf32>
    %528 = arith.divf %526, %527 : vector<8x16xf32>
    %529 = arith.mulf %528, %496 : vector<8x16xf32>
    %cst_84 = arith.constant 1.000000e+00 : f32
    %530 = vector.broadcast %cst_84 : f32 to vector<8x16xf32>
    %531 = arith.subf %530, %528 : vector<8x16xf32>
    %532 = vector.extract_strided_slice %519 {offsets = [0, 16], sizes = [8, 16], strides = [1, 1]} : vector<8x48xf32> to vector<8x16xf32>
    %533 = arith.mulf %531, %532 : vector<8x16xf32>
    %534 = arith.addf %529, %533 : vector<8x16xf32>
    %535 = arith.mulf %528, %503 : vector<8x16xf32>
    %cst_85 = arith.constant 1.000000e+00 : f32
    %536 = vector.broadcast %cst_85 : f32 to vector<8x16xf32>
    %537 = arith.subf %536, %528 : vector<8x16xf32>
    %538 = vector.extract_strided_slice %519 {offsets = [0, 32], sizes = [8, 16], strides = [1, 1]} : vector<8x48xf32> to vector<8x16xf32>
    %539 = arith.addf %496, %538 : vector<8x16xf32>
    %540 = arith.mulf %537, %539 : vector<8x16xf32>
    %541 = arith.addf %535, %540 : vector<8x16xf32>
    %542 = math.tanh %541 : vector<8x16xf32>
    %543 = vector.extract_strided_slice %342 {offsets = [40, 0], sizes = [8, 49], strides = [1, 1]} : vector<64x49xf32> to vector<8x49xf32>
    %544 = vector.extract_strided_slice %543 {offsets = [0, 0], sizes = [8, 48], strides = [1, 1]} : vector<8x49xf32> to vector<8x48xf32>
    %545 = vector.extract_strided_slice %543 {offsets = [0, 48], sizes = [8, 1], strides = [1, 1]} : vector<8x49xf32> to vector<8x1xf32>
    %546 = tpu.concatenate %542, %534 in 1 : vector<8x16xf32>, vector<8x16xf32> -> vector<8x32xf32>
    %547 = arith.truncf %546 : vector<8x32xf32> to vector<8x32xbf16>
    %cst_86 = arith.constant dense<0.000000e+00> : vector<8x17xf32>
    %548 = tpu.matmul %547, %346, %cst_86 {dimension_numbers = #tpu.dot_dimension_numbers<[1], [0], [0], [1], [0, 0, 1, 1], [], []>} : vector<8x32xbf16>, vector<32x17xbf16>, vector<8x17xf32> -> vector<8x17xf32>
    %549 = vector.extract_strided_slice %548 {offsets = [0, 16], sizes = [8, 1], strides = [1, 1]} : vector<8x17xf32> to vector<8x1xf32>
    %550 = arith.addf %545, %549 : vector<8x1xf32>
    %cst_87 = arith.constant 0.000000e+00 : f32
    %551 = vector.broadcast %cst_87 : f32 to vector<8x1xf32>
    %552 = arith.cmpf oge, %550, %551 : vector<8x1xf32>
    %553 = arith.extui %552 : vector<8x1xi1> to vector<8x1xi32>
    %554 = arith.sitofp %553 : vector<8x1xi32> to vector<8x1xf32>
    %555 = vector.broadcast %554 : vector<8x1xf32> to vector<8x48xf32>
    %556 = arith.mulf %555, %345 : vector<8x48xf32>
    %557 = arith.addf %544, %556 : vector<8x48xf32>
    %558 = vector.extract_strided_slice %548 {offsets = [0, 0], sizes = [8, 16], strides = [1, 1]} : vector<8x17xf32> to vector<8x16xf32>
    %559 = arith.addf %558, %349 : vector<8x16xf32>
    %560 = vector.extract_strided_slice %557 {offsets = [0, 0], sizes = [8, 16], strides = [1, 1]} : vector<8x48xf32> to vector<8x16xf32>
    %561 = arith.addf %560, %559 : vector<8x16xf32>
    %562 = arith.negf %561 : vector<8x16xf32>
    %563 = math.exp %562 : vector<8x16xf32>
    %cst_88 = arith.constant 1.000000e+00 : f32
    %564 = vector.broadcast %cst_88 : f32 to vector<8x16xf32>
    %565 = arith.addf %564, %563 : vector<8x16xf32>
    %566 = arith.divf %564, %565 : vector<8x16xf32>
    %567 = arith.mulf %566, %534 : vector<8x16xf32>
    %cst_89 = arith.constant 1.000000e+00 : f32
    %568 = vector.broadcast %cst_89 : f32 to vector<8x16xf32>
    %569 = arith.subf %568, %566 : vector<8x16xf32>
    %570 = vector.extract_strided_slice %557 {offsets = [0, 16], sizes = [8, 16], strides = [1, 1]} : vector<8x48xf32> to vector<8x16xf32>
    %571 = arith.mulf %569, %570 : vector<8x16xf32>
    %572 = arith.addf %567, %571 : vector<8x16xf32>
    %573 = arith.mulf %566, %541 : vector<8x16xf32>
    %cst_90 = arith.constant 1.000000e+00 : f32
    %574 = vector.broadcast %cst_90 : f32 to vector<8x16xf32>
    %575 = arith.subf %574, %566 : vector<8x16xf32>
    %576 = vector.extract_strided_slice %557 {offsets = [0, 32], sizes = [8, 16], strides = [1, 1]} : vector<8x48xf32> to vector<8x16xf32>
    %577 = arith.addf %534, %576 : vector<8x16xf32>
    %578 = arith.mulf %575, %577 : vector<8x16xf32>
    %579 = arith.addf %573, %578 : vector<8x16xf32>
    %580 = math.tanh %579 : vector<8x16xf32>
    %581 = vector.extract_strided_slice %342 {offsets = [48, 0], sizes = [8, 49], strides = [1, 1]} : vector<64x49xf32> to vector<8x49xf32>
    %582 = vector.extract_strided_slice %581 {offsets = [0, 0], sizes = [8, 48], strides = [1, 1]} : vector<8x49xf32> to vector<8x48xf32>
    %583 = vector.extract_strided_slice %581 {offsets = [0, 48], sizes = [8, 1], strides = [1, 1]} : vector<8x49xf32> to vector<8x1xf32>
    %584 = tpu.concatenate %580, %572 in 1 : vector<8x16xf32>, vector<8x16xf32> -> vector<8x32xf32>
    %585 = arith.truncf %584 : vector<8x32xf32> to vector<8x32xbf16>
    %cst_91 = arith.constant dense<0.000000e+00> : vector<8x17xf32>
    %586 = tpu.matmul %585, %346, %cst_91 {dimension_numbers = #tpu.dot_dimension_numbers<[1], [0], [0], [1], [0, 0, 1, 1], [], []>} : vector<8x32xbf16>, vector<32x17xbf16>, vector<8x17xf32> -> vector<8x17xf32>
    %587 = vector.extract_strided_slice %586 {offsets = [0, 16], sizes = [8, 1], strides = [1, 1]} : vector<8x17xf32> to vector<8x1xf32>
    %588 = arith.addf %583, %587 : vector<8x1xf32>
    %cst_92 = arith.constant 0.000000e+00 : f32
    %589 = vector.broadcast %cst_92 : f32 to vector<8x1xf32>
    %590 = arith.cmpf oge, %588, %589 : vector<8x1xf32>
    %591 = arith.extui %590 : vector<8x1xi1> to vector<8x1xi32>
    %592 = arith.sitofp %591 : vector<8x1xi32> to vector<8x1xf32>
    %593 = vector.broadcast %592 : vector<8x1xf32> to vector<8x48xf32>
    %594 = arith.mulf %593, %345 : vector<8x48xf32>
    %595 = arith.addf %582, %594 : vector<8x48xf32>
    %596 = vector.extract_strided_slice %586 {offsets = [0, 0], sizes = [8, 16], strides = [1, 1]} : vector<8x17xf32> to vector<8x16xf32>
    %597 = arith.addf %596, %349 : vector<8x16xf32>
    %598 = vector.extract_strided_slice %595 {offsets = [0, 0], sizes = [8, 16], strides = [1, 1]} : vector<8x48xf32> to vector<8x16xf32>
    %599 = arith.addf %598, %597 : vector<8x16xf32>
    %600 = arith.negf %599 : vector<8x16xf32>
    %601 = math.exp %600 : vector<8x16xf32>
    %cst_93 = arith.constant 1.000000e+00 : f32
    %602 = vector.broadcast %cst_93 : f32 to vector<8x16xf32>
    %603 = arith.addf %602, %601 : vector<8x16xf32>
    %604 = arith.divf %602, %603 : vector<8x16xf32>
    %605 = arith.mulf %604, %572 : vector<8x16xf32>
    %cst_94 = arith.constant 1.000000e+00 : f32
    %606 = vector.broadcast %cst_94 : f32 to vector<8x16xf32>
    %607 = arith.subf %606, %604 : vector<8x16xf32>
    %608 = vector.extract_strided_slice %595 {offsets = [0, 16], sizes = [8, 16], strides = [1, 1]} : vector<8x48xf32> to vector<8x16xf32>
    %609 = arith.mulf %607, %608 : vector<8x16xf32>
    %610 = arith.addf %605, %609 : vector<8x16xf32>
    %611 = arith.mulf %604, %579 : vector<8x16xf32>
    %cst_95 = arith.constant 1.000000e+00 : f32
    %612 = vector.broadcast %cst_95 : f32 to vector<8x16xf32>
    %613 = arith.subf %612, %604 : vector<8x16xf32>
    %614 = vector.extract_strided_slice %595 {offsets = [0, 32], sizes = [8, 16], strides = [1, 1]} : vector<8x48xf32> to vector<8x16xf32>
    %615 = arith.addf %572, %614 : vector<8x16xf32>
    %616 = arith.mulf %613, %615 : vector<8x16xf32>
    %617 = arith.addf %611, %616 : vector<8x16xf32>
    %618 = math.tanh %617 : vector<8x16xf32>
    %619 = vector.extract_strided_slice %342 {offsets = [56, 0], sizes = [8, 49], strides = [1, 1]} : vector<64x49xf32> to vector<8x49xf32>
    %620 = vector.extract_strided_slice %619 {offsets = [0, 48], sizes = [8, 1], strides = [1, 1]} : vector<8x49xf32> to vector<8x1xf32>
    %621 = tpu.concatenate %618, %610 in 1 : vector<8x16xf32>, vector<8x16xf32> -> vector<8x32xf32>
    %622 = arith.truncf %621 : vector<8x32xf32> to vector<8x32xbf16>
    %cst_96 = arith.constant dense<0.000000e+00> : vector<8x17xf32>
    %623 = tpu.matmul %622, %346, %cst_96 {dimension_numbers = #tpu.dot_dimension_numbers<[1], [0], [0], [1], [0, 0, 1, 1], [], []>} : vector<8x32xbf16>, vector<32x17xbf16>, vector<8x17xf32> -> vector<8x17xf32>
    %624 = vector.extract_strided_slice %623 {offsets = [0, 16], sizes = [8, 1], strides = [1, 1]} : vector<8x17xf32> to vector<8x1xf32>
    %625 = arith.addf %620, %624 : vector<8x1xf32>
    %cst_97 = arith.constant 0.000000e+00 : f32
    %626 = vector.broadcast %cst_97 : f32 to vector<8x1xf32>
    %627 = arith.cmpf oge, %625, %626 : vector<8x1xf32>
    %628 = arith.extui %627 : vector<8x1xi1> to vector<8x1xi32>
    %629 = arith.sitofp %628 : vector<8x1xi32> to vector<8x1xf32>
    %630 = tpu.concatenate %364, %402, %440, %478, %516, %554, %592, %629 in 1 : vector<8x1xf32>, vector<8x1xf32>, vector<8x1xf32>, vector<8x1xf32>, vector<8x1xf32>, vector<8x1xf32>, vector<8x1xf32>, vector<8x1xf32> -> vector<8x8xf32>
    %c0_98 = arith.constant 0 : index
    %c0_99 = arith.constant 0 : index
    %631 = vector.load %arg11[%c0_98, %c0_99] : memref<8x8xf32, #tpu.memory_space<vmem>>, vector<8x8xf32>
    tpu.vector_store %arg11[%c0_98, %c0_99], %630 {strides = array<i32>} : memref<8x8xf32, #tpu.memory_space<vmem>>, vector<8x8xf32>,
    %632 = tpu.concatenate %360, %398, %436, %474, %512, %550, %588, %625 in 1 : vector<8x1xf32>, vector<8x1xf32>, vector<8x1xf32>, vector<8x1xf32>, vector<8x1xf32>, vector<8x1xf32>, vector<8x1xf32>, vector<8x1xf32> -> vector<8x8xf32>
    %c0_100 = arith.constant 0 : index
    %c0_101 = arith.constant 0 : index
    %633 = vector.load %arg12[%c0_100, %c0_101] : memref<8x8xf32, #tpu.memory_space<vmem>>, vector<8x8xf32>
    tpu.vector_store %arg12[%c0_100, %c0_101], %632 {strides = array<i32>} : memref<8x8xf32, #tpu.memory_space<vmem>>, vector<8x8xf32>,
    return
  }
}

</mosaic_0001>

<llo_original>
// kernel: tile.6
$region0: #{tile.6}
  #allocation0 [shape = 's32[1]{0}', space=sflag, size = 0x4, scoped, tag = 'scoped memory for tile.6']
  %s0 = inlined_call_operand.vmem [shape: f32[64], index: 0, kind: input, shape index: {}]
  %s1 = inlined_call_operand.vmem [shape: f32[4,64], index: 1, kind: output, shape index: {}]
  // Predicated region
  $region2: #{tile.6} parent=0 // pred_check
    _
  $region3: #{tile.6} parent=0 // pred_check_branch
    %3 = sbr.rel (0) target = $region5
  $region4: #{tile.6} parent=0 // pred_region
    _
  $region5: #{tile.6} parent=0 // pred_fallthru
    _
  %v4 = vld [vmem:[%s0] ss:$0 sm:$0xff]
  %5 = vst [vmem:[%s1] sm:$0xf] %v4

// kernel: tile.7
$region0: #{tile.7}
  %s0 = inlined_call_operand.vmem [shape: f32[4,64], index: 0, kind: input, shape index: {}]
  %s1 = inlined_call_operand.vmem [shape: f32[1,256], index: 1, kind: output, shape index: {}]
  $region1: #{tile.7} parent=0
    #allocation0 [shape = 'u8[8192]{0}', space=vmem, size = 0x2000, scoped, tag = 'scoped mem for output reshape']
    #allocation1 [shape = 'u8[4096]{0}', space=vmem, size = 0x1000, scoped, tag = 'scoped mem for input reshape']
    %s3 = sshllo.u32 0, 4
    %v4 = vld [vmem:[%s0] sm:%s3]
    %5 = vst [vmem:[#allocation1] sm:%s3] %v4
    %s6 = smov 3
    %v7 = vld [vmem:[#allocation1] ss:$2 sm:%s6]
    %vm8 = vcmask 523264
    %9 = vst.msk [vmem:[#allocation0] ss:$8 sm:$0x3] %vm8, %v7
    %s10 = scalar_lea.vmem [#allocation1], 1
    %s11 = smov 3
    %v12 = vld [vmem:[%s10] ss:$2 sm:%s11]
    %13 = vrot.lane.b32.xlu0 %v12, 64
    %v14 = vpop.permute.xlu0 %13
    %vm15 = vcmask 1048064
    %16 = vst.msk [vmem:[#allocation0] ss:$8 sm:$0x3] %vm15, %v14
    %s18 = sshllo.u32 0, 1
    %v20 = vld [vmem:[#allocation0] sm:%s18]
    %s21 = sshllo.u32 0, 1
    %22 = vst [vmem:[%s1] sm:%s21] %v20
    %s23 = scalar_lea.vmem [#allocation0], 8
    %v24 = vld [vmem:[%s23] sm:%s18]
    %s25 = sshllo.u32 0, 1
    %s26 = scalar_lea.vmem %s1, 1
    %27 = vst [vmem:[%s26] sm:%s25] %v24

// kernel: dependent_generator_forward.1
$region0: #{dependent_generator_forward.1}
  #allocation0 [shape = 'u32[]', space=smem, size = 0x4, offset = 0x4, fixed_abs, tag = 'smem constant byte address 0x4 - core index']
  #allocation1 [shape = 'u32[144,128]{1,0:T(1,128)}', space=vmem, size = 0x12000, scoped, tag = 'internal scratch']
  %s0 = inlined_call_operand.vmem [shape: f32[64,32], index: 0, kind: input, shape index: {}]
  %s1 = inlined_call_operand.vmem [shape: bf16[32,256], index: 1, kind: input, shape index: {}]
  %s2 = inlined_call_operand.vmem [shape: f32[1,256], index: 2, kind: input, shape index: {}]
  %s3 = inlined_call_operand.vmem [shape: bf16[64,256], index: 3, kind: input, shape index: {}]
  %s4 = inlined_call_operand.vmem [shape: f32[1,256], index: 4, kind: input, shape index: {}]
  %s5 = inlined_call_operand.vmem [shape: f32[1,64], index: 5, kind: input, shape index: {}]
  %s6 = inlined_call_operand.vmem [shape: bf16[64,49], index: 6, kind: input, shape index: {}]
  %s7 = inlined_call_operand.vmem [shape: f32[1,49], index: 7, kind: input, shape index: {}]
  %s8 = inlined_call_operand.vmem [shape: f32[1,48], index: 8, kind: input, shape index: {}]
  %s9 = inlined_call_operand.vmem [shape: bf16[32,17], index: 9, kind: input, shape index: {}]
  %s10 = inlined_call_operand.vmem [shape: f32[1,16], index: 10, kind: input, shape index: {}]
  %s11 = inlined_call_operand.vmem [shape: f32[8,8], index: 11, kind: output, shape index: {0}]
  %s12 = inlined_call_operand.vmem [shape: f32[8,8], index: 12, kind: output, shape index: {1}]
  %13 = xla_tuple %s11, %s12
  %s14 = sld [smem:[#allocation0]]
  $region62: #{dependent_generator_forward.1} parent=0
    _
  %s16 = ssub.s32 1, %s14
  %s17 = scalar_select 0, %s16, %s14
  // Predicated region
  $region2: #{dependent_generator_forward.1} parent=0 // pred_check
    _
  $region3: #{dependent_generator_forward.1} parent=0 // pred_check_branch
    %19 = sbr.rel (0) target = $region5
  $region4: #{dependent_generator_forward.1} parent=0 // pred_region
    _
  $region5: #{dependent_generator_forward.1} parent=0 // pred_fallthru
    _
  // Predicated region
  $region6: #{dependent_generator_forward.1} parent=0 // pred_check
    _
  $region7: #{dependent_generator_forward.1} parent=0 // pred_check_branch
    %21 = sbr.rel (0) target = $region9
  $region8: #{dependent_generator_forward.1} parent=0 // pred_region
    _
  $region9: #{dependent_generator_forward.1} parent=0 // pred_fallthru
    _
  // Predicated region
  $region10: #{dependent_generator_forward.1} parent=0 // pred_check
    _
  $region11: #{dependent_generator_forward.1} parent=0 // pred_check_branch
    %23 = sbr.rel (0) target = $region13
  $region12: #{dependent_generator_forward.1} parent=0 // pred_region
    _
  $region13: #{dependent_generator_forward.1} parent=0 // pred_fallthru
    _
  // Predicated region
  $region14: #{dependent_generator_forward.1} parent=0 // pred_check
    _
  $region15: #{dependent_generator_forward.1} parent=0 // pred_check_branch
    %25 = sbr.rel (0) target = $region17
  $region16: #{dependent_generator_forward.1} parent=0 // pred_region
    _
  $region17: #{dependent_generator_forward.1} parent=0 // pred_fallthru
    _
  // Predicated region
  $region18: #{dependent_generator_forward.1} parent=0 // pred_check
    _
  $region19: #{dependent_generator_forward.1} parent=0 // pred_check_branch
    %27 = sbr.rel (0) target = $region21
  $region20: #{dependent_generator_forward.1} parent=0 // pred_region
    _
  $region21: #{dependent_generator_forward.1} parent=0 // pred_fallthru
    _
  // Predicated region
  $region22: #{dependent_generator_forward.1} parent=0 // pred_check
    _
  $region23: #{dependent_generator_forward.1} parent=0 // pred_check_branch
    %29 = sbr.rel (0) target = $region25
  $region24: #{dependent_generator_forward.1} parent=0 // pred_region
    _
  $region25: #{dependent_generator_forward.1} parent=0 // pred_fallthru
    _
  // Predicated region
  $region26: #{dependent_generator_forward.1} parent=0 // pred_check
    _
  $region27: #{dependent_generator_forward.1} parent=0 // pred_check_branch
    %31 = sbr.rel (0) target = $region29
  $region28: #{dependent_generator_forward.1} parent=0 // pred_region
    _
  $region29: #{dependent_generator_forward.1} parent=0 // pred_fallthru
    _
  // Predicated region
  $region30: #{dependent_generator_forward.1} parent=0 // pred_check
    _
  $region31: #{dependent_generator_forward.1} parent=0 // pred_check_branch
    %33 = sbr.rel (0) target = $region33
  $region32: #{dependent_generator_forward.1} parent=0 // pred_region
    _
  $region33: #{dependent_generator_forward.1} parent=0 // pred_fallthru
    _
  // Predicated region
  $region34: #{dependent_generator_forward.1} parent=0 // pred_check
    _
  $region35: #{dependent_generator_forward.1} parent=0 // pred_check_branch
    %35 = sbr.rel (0) target = $region37
  $region36: #{dependent_generator_forward.1} parent=0 // pred_region
    _
  $region37: #{dependent_generator_forward.1} parent=0 // pred_fallthru
    _
  // Predicated region
  $region38: #{dependent_generator_forward.1} parent=0 // pred_check
    _
  $region39: #{dependent_generator_forward.1} parent=0 // pred_check_branch
    %37 = sbr.rel (0) target = $region41
  $region40: #{dependent_generator_forward.1} parent=0 // pred_region
    _
  $region41: #{dependent_generator_forward.1} parent=0 // pred_fallthru
    _
  // Predicated region
  $region42: #{dependent_generator_forward.1} parent=0 // pred_check
    _
  $region43: #{dependent_generator_forward.1} parent=0 // pred_check_branch
    %39 = sbr.rel (0) target = $region45
  $region44: #{dependent_generator_forward.1} parent=0 // pred_region
    _
  $region45: #{dependent_generator_forward.1} parent=0 // pred_fallthru
    _
  %v41 = vld [vmem:[%s0] sm:$0xff]
  %v42 = vld [vmem:[%s0 + $0x8] sm:$0xff]
  %v43 = vld [vmem:[%s0 + $0x10] sm:$0xff]
  %v44 = vld [vmem:[%s0 + $0x18] sm:$0xff]
  %v45 = vld [vmem:[%s0 + $0x20] sm:$0xff]
  %v46 = vld [vmem:[%s0 + $0x28] sm:$0xff]
  %v47 = vld [vmem:[%s0 + $0x30] sm:$0xff]
  %v48 = vld [vmem:[%s0 + $0x38] sm:$0xff]
  %v49 = vpack.c.bf16 %v42, %v41
  %v50 = vpack.c.bf16 %v44, %v43
  %v51 = vpack.c.bf16 %v46, %v45
  %v52 = vpack.c.bf16 %v48, %v47
  %v53 = vld [vmem:[%s1] sm:$0xff]
  %v54 = vld [vmem:[%s1 + $0x8] sm:$0xff]
  %v55 = vld [vmem:[%s1 + $0x10] sm:$0xff]
  %v56 = vld [vmem:[%s1 + $0x18] sm:$0xff]
  %v57 = vld [vmem:[%s2] sm:$0x3]
  %v59 = vlaneseq
  %v60 = vshrl.u32 %v59, 7
  %v61 = vsub.s32 0, %v60
  %v62 = vrot.slane %v57, %v61
  %v63 = vlaneseq
  %v64 = vshrl.u32 %v63, 7
  %v65 = vsub.s32 1, %v64
  %v66 = vrot.slane %v57, %v65
  %v73 = vunpack.c.l.b16 %v53
  %v74 = vunpack.c.h.b16 %v53
  %v75 = vunpack.c.l.b16 %v54
  %v76 = vunpack.c.h.b16 %v54
  %v77 = vunpack.c.l.b16 %v55
  %v78 = vunpack.c.h.b16 %v55
  %v79 = vunpack.c.l.b16 %v56
  %v80 = vunpack.c.h.b16 %v56
  %v81 = vpack.c.b16 %v75, %v73
  %v82 = vpack.c.b16 %v76, %v74
  %v83 = vpack.c.b16 %v79, %v77
  %v84 = vpack.c.b16 %v80, %v78
  %vm89 = vcmask 261120
  %v91 = vsel %vm89, %v49, 0
  %v94 = vsel %vm89, %v50, 0
  %v97 = vsel %vm89, %v51, 0
  %v100 = vsel %vm89, %v52, 0
  %102 = vmatprep.subr.bf16.mxu0 %v82
  %103 = vmatpush1.bf16.msra.mxu0 %v81
  %104 = vmatprep.subr.bf16.mxu0 %v84
  %105 = vmatpush1.bf16.msra.mxu0 %v83
  %106 = vmatprep.subr.bf16.mxu0 0
  %107 = vmatpush1.bf16.msra.mxu0 0
  %108 = vmatprep.subr.bf16.mxu0 0
  %109 = vmatpush1.bf16.msra.mxu0 0
  %110 = vmatprep.subr.bf16.mxu0 0
  %111 = vmatpush1.bf16.msra.mxu0 0
  %112 = vmatprep.subr.bf16.mxu0 0
  %113 = vmatpush1.bf16.msra.mxu0 0
  %114 = vmatprep.subr.bf16.mxu0 0
  %115 = vmatpush1.bf16.msra.mxu0 0
  %116 = vmatprep.subr.bf16.mxu0 0
  %117 = vmatpush1.bf16.msra.mxu0 0
  %118 = vmatprep.subr.bf16.mxu0 0
  %119 = vmatpush1.bf16.msra.mxu0 0
  %120 = vmatprep.subr.bf16.mxu0 0
  %121 = vmatpush1.bf16.msra.mxu0 0
  %122 = vmatprep.subr.bf16.mxu0 0
  %123 = vmatpush1.bf16.msra.mxu0 0
  %124 = vmatprep.subr.bf16.mxu0 0
  %125 = vmatpush1.bf16.msra.mxu0 0
  %126 = vmatprep.subr.bf16.mxu0 0
  %127 = vmatpush1.bf16.msra.mxu0 0
  %128 = vmatprep.subr.bf16.mxu0 0
  %129 = vmatpush1.bf16.msra.mxu0 0
  %130 = vmatprep.subr.bf16.mxu0 0
  %131 = vmatpush1.bf16.msra.mxu0 0
  %132 = vmatprep.subr.bf16.mxu0 0
  %133 = vmatpush1.bf16.msra.mxu0 0
  %134 = vmatprep.mubr.bf16.mxu0 0
  %135 = vmatmul.mubr.bf16.gmra.mrb[0].mxu0 %v91
  %v136 = vpop.f32.mrb[0].mxu0
  %v137 = vadd.f32 %v62, %v136
  %v138 = vpop.f32.mrb[0].mxu0
  %v139 = vadd.f32 %v66, %v138
  %v140 = vpop.f32.mrb[0].mxu0
  %v141 = vadd.f32 %v62, %v140
  %v142 = vpop.f32.mrb[0].mxu0
  %v143 = vadd.f32 %v66, %v142
  %144 = vmatprep.mubr.bf16.mxu0 0
  %145 = vmatmul.mubr.bf16.gmra.mrb[0].mxu0 %v94
  %v146 = vpop.f32.mrb[0].mxu0
  %v147 = vadd.f32 %v62, %v146
  %v148 = vpop.f32.mrb[0].mxu0
  %v149 = vadd.f32 %v66, %v148
  %v150 = vpop.f32.mrb[0].mxu0
  %v151 = vadd.f32 %v62, %v150
  %v152 = vpop.f32.mrb[0].mxu0
  %v153 = vadd.f32 %v66, %v152
  %154 = vmatprep.mubr.bf16.mxu0 0
  %155 = vmatmul.mubr.bf16.gmra.mrb[0].mxu0 %v97
  %v156 = vpop.f32.mrb[0].mxu0
  %v157 = vadd.f32 %v62, %v156
  %v158 = vpop.f32.mrb[0].mxu0
  %v159 = vadd.f32 %v66, %v158
  %v160 = vpop.f32.mrb[0].mxu0
  %v161 = vadd.f32 %v62, %v160
  %v162 = vpop.f32.mrb[0].mxu0
  %v163 = vadd.f32 %v66, %v162
  %164 = vmatprep.mubr.bf16.mxu0 0
  %165 = vmatmul.mubr.bf16.gmra.mrb[0].mxu0 %v100
  %v166 = vpop.f32.mrb[0].mxu0
  %v167 = vadd.f32 %v62, %v166
  %v168 = vpop.f32.mrb[0].mxu0
  %v169 = vadd.f32 %v66, %v168
  %v170 = vpop.f32.mrb[0].mxu0
  %v171 = vadd.f32 %v62, %v170
  %v172 = vpop.f32.mrb[0].mxu0
  %v173 = vadd.f32 %v66, %v172
  %174 = vdwg.mxu0
  %v175 = vld [vmem:[%s3] sm:$0xff]
  %v176 = vld [vmem:[%s3 + $0x8] sm:$0xff]
  %v177 = vld [vmem:[%s3 + $0x10] sm:$0xff]
  %v178 = vld [vmem:[%s3 + $0x18] sm:$0xff]
  %v179 = vld [vmem:[%s3 + $0x20] sm:$0xff]
  %v180 = vld [vmem:[%s3 + $0x28] sm:$0xff]
  %v181 = vld [vmem:[%s3 + $0x30] sm:$0xff]
  %v182 = vld [vmem:[%s3 + $0x38] sm:$0xff]
  %v183 = vld [vmem:[%s4] sm:$0x3]
  %v184 = vsub.f32 1.0, %v183
  %v185 = vld [vmem:[%s5] sm:$0x1]
  %v186 = vsub.f32 1.0, %v185
  %v188 = vlaneseq
  %v189 = vshrl.u32 %v188, 7
  %v190 = vsub.s32 0, %v189
  %v191 = vrot.slane %v183, %v190
  %v192 = vlaneseq
  %v193 = vshrl.u32 %v192, 7
  %v194 = vsub.s32 1, %v193
  %v195 = vrot.slane %v183, %v194
  %v198 = vmul.f32 %v191, %v137
  %v199 = vmul.f32 %v195, %v139
  %v201 = vlaneseq
  %v202 = vshrl.u32 %v201, 7
  %v203 = vsub.s32 0, %v202
  %v204 = vrot.slane %v184, %v203
  %v205 = vlaneseq
  %v206 = vshrl.u32 %v205, 7
  %v207 = vsub.s32 1, %v206
  %v208 = vrot.slane %v184, %v207
  %v211 = vmul.f32 %v204, %v171
  %v212 = vmul.f32 %v208, %v173
  %v213 = vadd.f32 %v198, %v211
  %v214 = vadd.f32 %v199, %v212
  %v223 = vunpack.c.l.b16 %v175
  %v224 = vunpack.c.h.b16 %v175
  %v225 = vunpack.c.l.b16 %v176
  %v226 = vunpack.c.h.b16 %v176
  %v227 = vunpack.c.l.b16 %v177
  %v228 = vunpack.c.h.b16 %v177
  %v229 = vunpack.c.l.b16 %v178
  %v230 = vunpack.c.h.b16 %v178
  %v231 = vunpack.c.l.b16 %v179
  %v232 = vunpack.c.h.b16 %v179
  %v233 = vunpack.c.l.b16 %v180
  %v234 = vunpack.c.h.b16 %v180
  %v235 = vunpack.c.l.b16 %v181
  %v236 = vunpack.c.h.b16 %v181
  %v237 = vunpack.c.l.b16 %v182
  %v238 = vunpack.c.h.b16 %v182
  %v239 = vpack.c.b16 %v225, %v223
  %v240 = vpack.c.b16 %v226, %v224
  %v241 = vpack.c.b16 %v229, %v227
  %v242 = vpack.c.b16 %v230, %v228
  %v243 = vpack.c.b16 %v233, %v231
  %v244 = vpack.c.b16 %v234, %v232
  %v245 = vpack.c.b16 %v237, %v235
  %v246 = vpack.c.b16 %v238, %v236
  %vm255 = vcmask 523264
  %v257 = vsel %vm255, 0, 0
  %259 = vmatprep.subr.bf16.mxu0 %v240
  %260 = vmatpush1.bf16.msra.mxu0 %v239
  %261 = vmatprep.subr.bf16.mxu0 %v242
  %262 = vmatpush1.bf16.msra.mxu0 %v241
  %263 = vmatprep.subr.bf16.mxu0 %v244
  %264 = vmatpush1.bf16.msra.mxu0 %v243
  %265 = vmatprep.subr.bf16.mxu0 %v246
  %266 = vmatpush1.bf16.msra.mxu0 %v245
  %267 = vmatprep.subr.bf16.mxu0 0
  %268 = vmatpush1.bf16.msra.mxu0 0
  %269 = vmatprep.subr.bf16.mxu0 0
  %270 = vmatpush1.bf16.msra.mxu0 0
  %271 = vmatprep.subr.bf16.mxu0 0
  %272 = vmatpush1.bf16.msra.mxu0 0
  %273 = vmatprep.subr.bf16.mxu0 0
  %274 = vmatpush1.bf16.msra.mxu0 0
  %275 = vmatprep.subr.bf16.mxu0 0
  %276 = vmatpush1.bf16.msra.mxu0 0
  %277 = vmatprep.subr.bf16.mxu0 0
  %278 = vmatpush1.bf16.msra.mxu0 0
  %279 = vmatprep.subr.bf16.mxu0 0
  %280 = vmatpush1.bf16.msra.mxu0 0
  %281 = vmatprep.subr.bf16.mxu0 0
  %282 = vmatpush1.bf16.msra.mxu0 0
  %283 = vmatprep.subr.bf16.mxu0 0
  %284 = vmatpush1.bf16.msra.mxu0 0
  %285 = vmatprep.subr.bf16.mxu0 0
  %286 = vmatpush1.bf16.msra.mxu0 0
  %287 = vmatprep.subr.bf16.mxu0 0
  %288 = vmatpush1.bf16.msra.mxu0 0
  %289 = vmatprep.subr.bf16.mxu0 0
  %290 = vmatpush1.bf16.msra.mxu0 0
  %291 = vmatprep.mubr.bf16.mxu0 0
  %292 = vmatmul.mubr.bf16.gmra.mrb[0].mxu0 %v257
  %v293 = vpop.f32.mrb[0].mxu0
  %v294 = vadd.f32 0.0, %v293
  %v295 = vpop.f32.mrb[0].mxu0
  %v296 = vadd.f32 0.0, %v295
  %v297 = vpop.f32.mrb[0].mxu0
  %v298 = vpop.f32.mrb[0].mxu0
  %299 = vdwg.mxu0
  %v300 = vadd.f32 %v213, %v294
  %v301 = vadd.f32 %v214, %v296
  %v302 = vxor.u32 %v300, 2147483648
  %v303 = vmul.f32 %v302, 1.442695
  %v304 = vpow.pop %v303
  %v305 = vadd.f32 %v304, 1.0
  %v306 = vrcp.pop %v305
  %v307 = vmul.f32 1.0, %v306
  %v308 = vtanh.pop %v301
  %v309 = vxor.u32 %v301, 2147483648
  %v310 = vmul.f32 %v309, 1.442695
  %v311 = vpow.pop %v310
  %v312 = vadd.f32 %v311, 1.0
  %v313 = vrcp.pop %v312
  %v314 = vmul.f32 1.0, %v313
  %v315 = vmul.f32 %v307, 0.0
  %v316 = vmul.f32 %v307, %v308
  %318 = vrot.lane.b32.xlu0 %v316, 64
  %v319 = vpop.permute.xlu0 %318
  %v321 = vadd.f32 %v315, %v319
  %v322 = vtanh.pop %v321
  %v323 = vmul.f32 %v314, %v322
  %v324 = vmul.f32 %v191, %v141
  %v325 = vmul.f32 %v195, %v143
  %v326 = vmul.f32 %v204, %v167
  %v327 = vmul.f32 %v208, %v169
  %v328 = vadd.f32 %v324, %v326
  %v329 = vadd.f32 %v325, %v327
  %v330 = vpack.c.bf16 %v323, %v323
  %332 = vrot.lane.b32.xlu0 %v330, 64
  %v333 = vpop.permute.xlu0 %332
  %v335 = vsel %vm255, %v333, 0
  %337 = vmatprep.subr.bf16.mxu0 %v240
  %338 = vmatpush1.bf16.msra.mxu0 %v239
  %339 = vmatprep.subr.bf16.mxu0 %v242
  %340 = vmatpush1.bf16.msra.mxu0 %v241
  %341 = vmatprep.subr.bf16.mxu0 %v244
  %342 = vmatpush1.bf16.msra.mxu0 %v243
  %343 = vmatprep.subr.bf16.mxu0 %v246
  %344 = vmatpush1.bf16.msra.mxu0 %v245
  %345 = vmatprep.subr.bf16.mxu0 0
  %346 = vmatpush1.bf16.msra.mxu0 0
  %347 = vmatprep.subr.bf16.mxu0 0
  %348 = vmatpush1.bf16.msra.mxu0 0
  %349 = vmatprep.subr.bf16.mxu0 0
  %350 = vmatpush1.bf16.msra.mxu0 0
  %351 = vmatprep.subr.bf16.mxu0 0
  %352 = vmatpush1.bf16.msra.mxu0 0
  %353 = vmatprep.subr.bf16.mxu0 0
  %354 = vmatpush1.bf16.msra.mxu0 0
  %355 = vmatprep.subr.bf16.mxu0 0
  %356 = vmatpush1.bf16.msra.mxu0 0
  %357 = vmatprep.subr.bf16.mxu0 0
  %358 = vmatpush1.bf16.msra.mxu0 0
  %359 = vmatprep.subr.bf16.mxu0 0
  %360 = vmatpush1.bf16.msra.mxu0 0
  %361 = vmatprep.subr.bf16.mxu0 0
  %362 = vmatpush1.bf16.msra.mxu0 0
  %363 = vmatprep.subr.bf16.mxu0 0
  %364 = vmatpush1.bf16.msra.mxu0 0
  %365 = vmatprep.subr.bf16.mxu0 0
  %366 = vmatpush1.bf16.msra.mxu0 0
  %367 = vmatprep.subr.bf16.mxu0 0
  %368 = vmatpush1.bf16.msra.mxu0 0
  %369 = vmatprep.mubr.bf16.mxu0 0
  %370 = vmatmul.mubr.bf16.gmra.mrb[0].mxu0 %v335
  %v371 = vpop.f32.mrb[0].mxu0
  %v372 = vadd.f32 0.0, %v371
  %v373 = vpop.f32.mrb[0].mxu0
  %v374 = vadd.f32 0.0, %v373
  %v375 = vpop.f32.mrb[0].mxu0
  %v376 = vpop.f32.mrb[0].mxu0
  %377 = vdwg.mxu0
  %v378 = vadd.f32 %v328, %v372
  %v379 = vadd.f32 %v329, %v374
  %v380 = vxor.u32 %v378, 2147483648
  %v381 = vmul.f32 %v380, 1.442695
  %v382 = vpow.pop %v381
  %v383 = vadd.f32 %v382, 1.0
  %v384 = vrcp.pop %v383
  %v385 = vmul.f32 1.0, %v384
  %v386 = vtanh.pop %v379
  %v387 = vxor.u32 %v379, 2147483648
  %v388 = vmul.f32 %v387, 1.442695
  %v389 = vpow.pop %v388
  %v390 = vadd.f32 %v389, 1.0
  %v391 = vrcp.pop %v390
  %v392 = vmul.f32 1.0, %v391
  %v393 = vmul.f32 %v385, %v321
  %v394 = vmul.f32 %v385, %v386
  %396 = vrot.lane.b32.xlu0 %v394, 64
  %v397 = vpop.permute.xlu0 %396
  %v399 = vadd.f32 %v393, %v397
  %v400 = vtanh.pop %v399
  %v401 = vmul.f32 %v392, %v400
  %v402 = vmul.f32 %v191, %v147
  %v403 = vmul.f32 %v195, %v149
  %v404 = vmul.f32 %v204, %v161
  %v405 = vmul.f32 %v208, %v163
  %v406 = vadd.f32 %v402, %v404
  %v407 = vadd.f32 %v403, %v405
  %v408 = vpack.c.bf16 %v401, %v401
  %410 = vrot.lane.b32.xlu0 %v408, 64
  %v411 = vpop.permute.xlu0 %410
  %v413 = vsel %vm255, %v411, 0
  %415 = vmatprep.subr.bf16.mxu0 %v240
  %416 = vmatpush1.bf16.msra.mxu0 %v239
  %417 = vmatprep.subr.bf16.mxu0 %v242
  %418 = vmatpush1.bf16.msra.mxu0 %v241
  %419 = vmatprep.subr.bf16.mxu0 %v244
  %420 = vmatpush1.bf16.msra.mxu0 %v243
  %421 = vmatprep.subr.bf16.mxu0 %v246
  %422 = vmatpush1.bf16.msra.mxu0 %v245
  %423 = vmatprep.subr.bf16.mxu0 0
  %424 = vmatpush1.bf16.msra.mxu0 0
  %425 = vmatprep.subr.bf16.mxu0 0
  %426 = vmatpush1.bf16.msra.mxu0 0
  %427 = vmatprep.subr.bf16.mxu0 0
  %428 = vmatpush1.bf16.msra.mxu0 0
  %429 = vmatprep.subr.bf16.mxu0 0
  %430 = vmatpush1.bf16.msra.mxu0 0
  %431 = vmatprep.subr.bf16.mxu0 0
  %432 = vmatpush1.bf16.msra.mxu0 0
  %433 = vmatprep.subr.bf16.mxu0 0
  %434 = vmatpush1.bf16.msra.mxu0 0
  %435 = vmatprep.subr.bf16.mxu0 0
  %436 = vmatpush1.bf16.msra.mxu0 0
  %437 = vmatprep.subr.bf16.mxu0 0
  %438 = vmatpush1.bf16.msra.mxu0 0
  %439 = vmatprep.subr.bf16.mxu0 0
  %440 = vmatpush1.bf16.msra.mxu0 0
  %441 = vmatprep.subr.bf16.mxu0 0
  %442 = vmatpush1.bf16.msra.mxu0 0
  %443 = vmatprep.subr.bf16.mxu0 0
  %444 = vmatpush1.bf16.msra.mxu0 0
  %445 = vmatprep.subr.bf16.mxu0 0
  %446 = vmatpush1.bf16.msra.mxu0 0
  %447 = vmatprep.mubr.bf16.mxu0 0
  %448 = vmatmul.mubr.bf16.gmra.mrb[0].mxu0 %v413
  %v449 = vpop.f32.mrb[0].mxu0
  %v450 = vadd.f32 0.0, %v449
  %v451 = vpop.f32.mrb[0].mxu0
  %v452 = vadd.f32 0.0, %v451
  %v453 = vpop.f32.mrb[0].mxu0
  %v454 = vpop.f32.mrb[0].mxu0
  %455 = vdwg.mxu0
  %v456 = vadd.f32 %v406, %v450
  %v457 = vadd.f32 %v407, %v452
  %v458 = vxor.u32 %v456, 2147483648
  %v459 = vmul.f32 %v458, 1.442695
  %v460 = vpow.pop %v459
  %v461 = vadd.f32 %v460, 1.0
  %v462 = vrcp.pop %v461
  %v463 = vmul.f32 1.0, %v462
  %v464 = vtanh.pop %v457
  %v465 = vxor.u32 %v457, 2147483648
  %v466 = vmul.f32 %v465, 1.442695
  %v467 = vpow.pop %v466
  %v468 = vadd.f32 %v467, 1.0
  %v469 = vrcp.pop %v468
  %v470 = vmul.f32 1.0, %v469
  %v471 = vmul.f32 %v463, %v399
  %v472 = vmul.f32 %v463, %v464
  %474 = vrot.lane.b32.xlu0 %v472, 64
  %v475 = vpop.permute.xlu0 %474
  %v477 = vadd.f32 %v471, %v475
  %v478 = vtanh.pop %v477
  %v479 = vmul.f32 %v470, %v478
  %v480 = vmul.f32 %v191, %v151
  %v481 = vmul.f32 %v195, %v153
  %v482 = vmul.f32 %v204, %v157
  %v483 = vmul.f32 %v208, %v159
  %v484 = vadd.f32 %v480, %v482
  %v485 = vadd.f32 %v481, %v483
  %v486 = vpack.c.bf16 %v479, %v479
  %488 = vrot.lane.b32.xlu0 %v486, 64
  %v489 = vpop.permute.xlu0 %488
  %v491 = vsel %vm255, %v489, 0
  %493 = vmatprep.subr.bf16.mxu0 %v240
  %494 = vmatpush1.bf16.msra.mxu0 %v239
  %495 = vmatprep.subr.bf16.mxu0 %v242
  %496 = vmatpush1.bf16.msra.mxu0 %v241
  %497 = vmatprep.subr.bf16.mxu0 %v244
  %498 = vmatpush1.bf16.msra.mxu0 %v243
  %499 = vmatprep.subr.bf16.mxu0 %v246
  %500 = vmatpush1.bf16.msra.mxu0 %v245
  %501 = vmatprep.subr.bf16.mxu0 0
  %502 = vmatpush1.bf16.msra.mxu0 0
  %503 = vmatprep.subr.bf16.mxu0 0
  %504 = vmatpush1.bf16.msra.mxu0 0
  %505 = vmatprep.subr.bf16.mxu0 0
  %506 = vmatpush1.bf16.msra.mxu0 0
  %507 = vmatprep.subr.bf16.mxu0 0
  %508 = vmatpush1.bf16.msra.mxu0 0
  %509 = vmatprep.subr.bf16.mxu0 0
  %510 = vmatpush1.bf16.msra.mxu0 0
  %511 = vmatprep.subr.bf16.mxu0 0
  %512 = vmatpush1.bf16.msra.mxu0 0
  %513 = vmatprep.subr.bf16.mxu0 0
  %514 = vmatpush1.bf16.msra.mxu0 0
  %515 = vmatprep.subr.bf16.mxu0 0
  %516 = vmatpush1.bf16.msra.mxu0 0
  %517 = vmatprep.subr.bf16.mxu0 0
  %518 = vmatpush1.bf16.msra.mxu0 0
  %519 = vmatprep.subr.bf16.mxu0 0
  %520 = vmatpush1.bf16.msra.mxu0 0
  %521 = vmatprep.subr.bf16.mxu0 0
  %522 = vmatpush1.bf16.msra.mxu0 0
  %523 = vmatprep.subr.bf16.mxu0 0
  %524 = vmatpush1.bf16.msra.mxu0 0
  %525 = vmatprep.mubr.bf16.mxu0 0
  %526 = vmatmul.mubr.bf16.gmra.mrb[0].mxu0 %v491
  %v527 = vpop.f32.mrb[0].mxu0
  %v528 = vadd.f32 0.0, %v527
  %v529 = vpop.f32.mrb[0].mxu0
  %v530 = vadd.f32 0.0, %v529
  %v531 = vpop.f32.mrb[0].mxu0
  %v532 = vpop.f32.mrb[0].mxu0
  %533 = vdwg.mxu0
  %v534 = vadd.f32 %v484, %v528
  %v535 = vadd.f32 %v485, %v530
  %v536 = vxor.u32 %v534, 2147483648
  %v537 = vmul.f32 %v536, 1.442695
  %v538 = vpow.pop %v537
  %v539 = vadd.f32 %v538, 1.0
  %v540 = vrcp.pop %v539
  %v541 = vmul.f32 1.0, %v540
  %v542 = vtanh.pop %v535
  %v543 = vxor.u32 %v535, 2147483648
  %v544 = vmul.f32 %v543, 1.442695
  %v545 = vpow.pop %v544
  %v546 = vadd.f32 %v545, 1.0
  %v547 = vrcp.pop %v546
  %v548 = vmul.f32 1.0, %v547
  %v549 = vmul.f32 %v541, %v477
  %v550 = vmul.f32 %v541, %v542
  %552 = vrot.lane.b32.xlu0 %v550, 64
  %v553 = vpop.permute.xlu0 %552
  %v555 = vadd.f32 %v549, %v553
  %v556 = vtanh.pop %v555
  %v557 = vmul.f32 %v548, %v556
  %v558 = vmul.f32 %v191, %v157
  %v559 = vmul.f32 %v195, %v159
  %v560 = vmul.f32 %v204, %v151
  %v561 = vmul.f32 %v208, %v153
  %v562 = vadd.f32 %v558, %v560
  %v563 = vadd.f32 %v559, %v561
  %v564 = vpack.c.bf16 %v557, %v557
  %566 = vrot.lane.b32.xlu0 %v564, 64
  %v567 = vpop.permute.xlu0 %566
  %v569 = vsel %vm255, %v567, 0
  %571 = vmatprep.subr.bf16.mxu0 %v240
  %572 = vmatpush1.bf16.msra.mxu0 %v239
  %573 = vmatprep.subr.bf16.mxu0 %v242
  %574 = vmatpush1.bf16.msra.mxu0 %v241
  %575 = vmatprep.subr.bf16.mxu0 %v244
  %576 = vmatpush1.bf16.msra.mxu0 %v243
  %577 = vmatprep.subr.bf16.mxu0 %v246
  %578 = vmatpush1.bf16.msra.mxu0 %v245
  %579 = vmatprep.subr.bf16.mxu0 0
  %580 = vmatpush1.bf16.msra.mxu0 0
  %581 = vmatprep.subr.bf16.mxu0 0
  %582 = vmatpush1.bf16.msra.mxu0 0
  %583 = vmatprep.subr.bf16.mxu0 0
  %584 = vmatpush1.bf16.msra.mxu0 0
  %585 = vmatprep.subr.bf16.mxu0 0
  %586 = vmatpush1.bf16.msra.mxu0 0
  %587 = vmatprep.subr.bf16.mxu0 0
  %588 = vmatpush1.bf16.msra.mxu0 0
  %589 = vmatprep.subr.bf16.mxu0 0
  %590 = vmatpush1.bf16.msra.mxu0 0
  %591 = vmatprep.subr.bf16.mxu0 0
  %592 = vmatpush1.bf16.msra.mxu0 0
  %593 = vmatprep.subr.bf16.mxu0 0
  %594 = vmatpush1.bf16.msra.mxu0 0
  %595 = vmatprep.subr.bf16.mxu0 0
  %596 = vmatpush1.bf16.msra.mxu0 0
  %597 = vmatprep.subr.bf16.mxu0 0
  %598 = vmatpush1.bf16.msra.mxu0 0
  %599 = vmatprep.subr.bf16.mxu0 0
  %600 = vmatpush1.bf16.msra.mxu0 0
  %601 = vmatprep.subr.bf16.mxu0 0
  %602 = vmatpush1.bf16.msra.mxu0 0
  %603 = vmatprep.mubr.bf16.mxu0 0
  %604 = vmatmul.mubr.bf16.gmra.mrb[0].mxu0 %v569
  %v605 = vpop.f32.mrb[0].mxu0
  %v606 = vadd.f32 0.0, %v605
  %v607 = vpop.f32.mrb[0].mxu0
  %v608 = vadd.f32 0.0, %v607
  %v609 = vpop.f32.mrb[0].mxu0
  %v610 = vpop.f32.mrb[0].mxu0
  %611 = vdwg.mxu0
  %v612 = vadd.f32 %v562, %v606
  %v613 = vadd.f32 %v563, %v608
  %v614 = vxor.u32 %v612, 2147483648
  %v615 = vmul.f32 %v614, 1.442695
  %v616 = vpow.pop %v615
  %v617 = vadd.f32 %v616, 1.0
  %v618 = vrcp.pop %v617
  %v619 = vmul.f32 1.0, %v618
  %v620 = vtanh.pop %v613
  %v621 = vxor.u32 %v613, 2147483648
  %v622 = vmul.f32 %v621, 1.442695
  %v623 = vpow.pop %v622
  %v624 = vadd.f32 %v623, 1.0
  %v625 = vrcp.pop %v624
  %v626 = vmul.f32 1.0, %v625
  %v627 = vmul.f32 %v619, %v555
  %v628 = vmul.f32 %v619, %v620
  %630 = vrot.lane.b32.xlu0 %v628, 64
  %v631 = vpop.permute.xlu0 %630
  %v633 = vadd.f32 %v627, %v631
  %v634 = vtanh.pop %v633
  %v635 = vmul.f32 %v626, %v634
  %v636 = vmul.f32 %v191, %v161
  %v637 = vmul.f32 %v195, %v163
  %v638 = vmul.f32 %v204, %v147
  %v639 = vmul.f32 %v208, %v149
  %v640 = vadd.f32 %v636, %v638
  %v641 = vadd.f32 %v637, %v639
  %v642 = vpack.c.bf16 %v635, %v635
  %644 = vrot.lane.b32.xlu0 %v642, 64
  %v645 = vpop.permute.xlu0 %644
  %v647 = vsel %vm255, %v645, 0
  %649 = vmatprep.subr.bf16.mxu0 %v240
  %650 = vmatpush1.bf16.msra.mxu0 %v239
  %651 = vmatprep.subr.bf16.mxu0 %v242
  %652 = vmatpush1.bf16.msra.mxu0 %v241
  %653 = vmatprep.subr.bf16.mxu0 %v244
  %654 = vmatpush1.bf16.msra.mxu0 %v243
  %655 = vmatprep.subr.bf16.mxu0 %v246
  %656 = vmatpush1.bf16.msra.mxu0 %v245
  %657 = vmatprep.subr.bf16.mxu0 0
  %658 = vmatpush1.bf16.msra.mxu0 0
  %659 = vmatprep.subr.bf16.mxu0 0
  %660 = vmatpush1.bf16.msra.mxu0 0
  %661 = vmatprep.subr.bf16.mxu0 0
  %662 = vmatpush1.bf16.msra.mxu0 0
  %663 = vmatprep.subr.bf16.mxu0 0
  %664 = vmatpush1.bf16.msra.mxu0 0
  %665 = vmatprep.subr.bf16.mxu0 0
  %666 = vmatpush1.bf16.msra.mxu0 0
  %667 = vmatprep.subr.bf16.mxu0 0
  %668 = vmatpush1.bf16.msra.mxu0 0
  %669 = vmatprep.subr.bf16.mxu0 0
  %670 = vmatpush1.bf16.msra.mxu0 0
  %671 = vmatprep.subr.bf16.mxu0 0
  %672 = vmatpush1.bf16.msra.mxu0 0
  %673 = vmatprep.subr.bf16.mxu0 0
  %674 = vmatpush1.bf16.msra.mxu0 0
  %675 = vmatprep.subr.bf16.mxu0 0
  %676 = vmatpush1.bf16.msra.mxu0 0
  %677 = vmatprep.subr.bf16.mxu0 0
  %678 = vmatpush1.bf16.msra.mxu0 0
  %679 = vmatprep.subr.bf16.mxu0 0
  %680 = vmatpush1.bf16.msra.mxu0 0
  %681 = vmatprep.mubr.bf16.mxu0 0
  %682 = vmatmul.mubr.bf16.gmra.mrb[0].mxu0 %v647
  %v683 = vpop.f32.mrb[0].mxu0
  %v684 = vadd.f32 0.0, %v683
  %v685 = vpop.f32.mrb[0].mxu0
  %v686 = vadd.f32 0.0, %v685
  %v687 = vpop.f32.mrb[0].mxu0
  %v688 = vpop.f32.mrb[0].mxu0
  %689 = vdwg.mxu0
  %v690 = vadd.f32 %v640, %v684
  %v691 = vadd.f32 %v641, %v686
  %v692 = vxor.u32 %v690, 2147483648
  %v693 = vmul.f32 %v692, 1.442695
  %v694 = vpow.pop %v693
  %v695 = vadd.f32 %v694, 1.0
  %v696 = vrcp.pop %v695
  %v697 = vmul.f32 1.0, %v696
  %v698 = vtanh.pop %v691
  %v699 = vxor.u32 %v691, 2147483648
  %v700 = vmul.f32 %v699, 1.442695
  %v701 = vpow.pop %v700
  %v702 = vadd.f32 %v701, 1.0
  %v703 = vrcp.pop %v702
  %v704 = vmul.f32 1.0, %v703
  %v705 = vmul.f32 %v697, %v633
  %v706 = vmul.f32 %v697, %v698
  %708 = vrot.lane.b32.xlu0 %v706, 64
  %v709 = vpop.permute.xlu0 %708
  %v711 = vadd.f32 %v705, %v709
  %v712 = vtanh.pop %v711
  %v713 = vmul.f32 %v704, %v712
  %v714 = vmul.f32 %v191, %v167
  %v715 = vmul.f32 %v195, %v169
  %v716 = vmul.f32 %v204, %v141
  %v717 = vmul.f32 %v208, %v143
  %v718 = vadd.f32 %v714, %v716
  %v719 = vadd.f32 %v715, %v717
  %v720 = vpack.c.bf16 %v713, %v713
  %722 = vrot.lane.b32.xlu0 %v720, 64
  %v723 = vpop.permute.xlu0 %722
  %v725 = vsel %vm255, %v723, 0
  %727 = vmatprep.subr.bf16.mxu0 %v240
  %728 = vmatpush1.bf16.msra.mxu0 %v239
  %729 = vmatprep.subr.bf16.mxu0 %v242
  %730 = vmatpush1.bf16.msra.mxu0 %v241
  %731 = vmatprep.subr.bf16.mxu0 %v244
  %732 = vmatpush1.bf16.msra.mxu0 %v243
  %733 = vmatprep.subr.bf16.mxu0 %v246
  %734 = vmatpush1.bf16.msra.mxu0 %v245
  %735 = vmatprep.subr.bf16.mxu0 0
  %736 = vmatpush1.bf16.msra.mxu0 0
  %737 = vmatprep.subr.bf16.mxu0 0
  %738 = vmatpush1.bf16.msra.mxu0 0
  %739 = vmatprep.subr.bf16.mxu0 0
  %740 = vmatpush1.bf16.msra.mxu0 0
  %741 = vmatprep.subr.bf16.mxu0 0
  %742 = vmatpush1.bf16.msra.mxu0 0
  %743 = vmatprep.subr.bf16.mxu0 0
  %744 = vmatpush1.bf16.msra.mxu0 0
  %745 = vmatprep.subr.bf16.mxu0 0
  %746 = vmatpush1.bf16.msra.mxu0 0
  %747 = vmatprep.subr.bf16.mxu0 0
  %748 = vmatpush1.bf16.msra.mxu0 0
  %749 = vmatprep.subr.bf16.mxu0 0
  %750 = vmatpush1.bf16.msra.mxu0 0
  %751 = vmatprep.subr.bf16.mxu0 0
  %752 = vmatpush1.bf16.msra.mxu0 0
  %753 = vmatprep.subr.bf16.mxu0 0
  %754 = vmatpush1.bf16.msra.mxu0 0
  %755 = vmatprep.subr.bf16.mxu0 0
  %756 = vmatpush1.bf16.msra.mxu0 0
  %757 = vmatprep.subr.bf16.mxu0 0
  %758 = vmatpush1.bf16.msra.mxu0 0
  %759 = vmatprep.mubr.bf16.mxu0 0
  %760 = vmatmul.mubr.bf16.gmra.mrb[0].mxu0 %v725
  %v761 = vpop.f32.mrb[0].mxu0
  %v762 = vadd.f32 0.0, %v761
  %v763 = vpop.f32.mrb[0].mxu0
  %v764 = vadd.f32 0.0, %v763
  %v765 = vpop.f32.mrb[0].mxu0
  %v766 = vpop.f32.mrb[0].mxu0
  %767 = vdwg.mxu0
  %v768 = vadd.f32 %v718, %v762
  %v769 = vadd.f32 %v719, %v764
  %v770 = vxor.u32 %v768, 2147483648
  %v771 = vmul.f32 %v770, 1.442695
  %v772 = vpow.pop %v771
  %v773 = vadd.f32 %v772, 1.0
  %v774 = vrcp.pop %v773
  %v775 = vmul.f32 1.0, %v774
  %v776 = vtanh.pop %v769
  %v777 = vxor.u32 %v769, 2147483648
  %v778 = vmul.f32 %v777, 1.442695
  %v779 = vpow.pop %v778
  %v780 = vadd.f32 %v779, 1.0
  %v781 = vrcp.pop %v780
  %v782 = vmul.f32 1.0, %v781
  %v783 = vmul.f32 %v775, %v711
  %v784 = vmul.f32 %v775, %v776
  %786 = vrot.lane.b32.xlu0 %v784, 64
  %v787 = vpop.permute.xlu0 %786
  %v789 = vadd.f32 %v783, %v787
  %v790 = vtanh.pop %v789
  %v791 = vmul.f32 %v782, %v790
  %v792 = vmul.f32 %v191, %v171
  %v793 = vmul.f32 %v195, %v173
  %v794 = vmul.f32 %v204, %v137
  %v795 = vmul.f32 %v208, %v139
  %v796 = vadd.f32 %v792, %v794
  %v797 = vadd.f32 %v793, %v795
  %v798 = vpack.c.bf16 %v791, %v791
  %800 = vrot.lane.b32.xlu0 %v798, 64
  %v801 = vpop.permute.xlu0 %800
  %v803 = vsel %vm255, %v801, 0
  %805 = vmatprep.subr.bf16.mxu0 %v240
  %806 = vmatpush1.bf16.msra.mxu0 %v239
  %807 = vmatprep.subr.bf16.mxu0 %v242
  %808 = vmatpush1.bf16.msra.mxu0 %v241
  %809 = vmatprep.subr.bf16.mxu0 %v244
  %810 = vmatpush1.bf16.msra.mxu0 %v243
  %811 = vmatprep.subr.bf16.mxu0 %v246
  %812 = vmatpush1.bf16.msra.mxu0 %v245
  %813 = vmatprep.subr.bf16.mxu0 0
  %814 = vmatpush1.bf16.msra.mxu0 0
  %815 = vmatprep.subr.bf16.mxu0 0
  %816 = vmatpush1.bf16.msra.mxu0 0
  %817 = vmatprep.subr.bf16.mxu0 0
  %818 = vmatpush1.bf16.msra.mxu0 0
  %819 = vmatprep.subr.bf16.mxu0 0
  %820 = vmatpush1.bf16.msra.mxu0 0
  %821 = vmatprep.subr.bf16.mxu0 0
  %822 = vmatpush1.bf16.msra.mxu0 0
  %823 = vmatprep.subr.bf16.mxu0 0
  %824 = vmatpush1.bf16.msra.mxu0 0
  %825 = vmatprep.subr.bf16.mxu0 0
  %826 = vmatpush1.bf16.msra.mxu0 0
  %827 = vmatprep.subr.bf16.mxu0 0
  %828 = vmatpush1.bf16.msra.mxu0 0
  %829 = vmatprep.subr.bf16.mxu0 0
  %830 = vmatpush1.bf16.msra.mxu0 0
  %831 = vmatprep.subr.bf16.mxu0 0
  %832 = vmatpush1.bf16.msra.mxu0 0
  %833 = vmatprep.subr.bf16.mxu0 0
  %834 = vmatpush1.bf16.msra.mxu0 0
  %835 = vmatprep.subr.bf16.mxu0 0
  %836 = vmatpush1.bf16.msra.mxu0 0
  %837 = vmatprep.mubr.bf16.mxu0 0
  %838 = vmatmul.mubr.bf16.gmra.mrb[0].mxu0 %v803
  %v839 = vpop.f32.mrb[0].mxu0
  %v840 = vadd.f32 0.0, %v839
  %v841 = vpop.f32.mrb[0].mxu0
  %v842 = vadd.f32 0.0, %v841
  %v843 = vpop.f32.mrb[0].mxu0
  %v844 = vpop.f32.mrb[0].mxu0
  %845 = vdwg.mxu0
  %v846 = vadd.f32 %v796, %v840
  %v847 = vadd.f32 %v797, %v842
  %v848 = vxor.u32 %v846, 2147483648
  %v849 = vmul.f32 %v848, 1.442695
  %v850 = vpow.pop %v849
  %v851 = vadd.f32 %v850, 1.0
  %v852 = vrcp.pop %v851
  %v853 = vmul.f32 1.0, %v852
  %v854 = vtanh.pop %v847
  %v855 = vxor.u32 %v847, 2147483648
  %v856 = vmul.f32 %v855, 1.442695
  %v857 = vpow.pop %v856
  %v858 = vadd.f32 %v857, 1.0
  %v859 = vrcp.pop %v858
  %v860 = vmul.f32 1.0, %v859
  %v861 = vmul.f32 %v853, %v789
  %v862 = vmul.f32 %v853, %v854
  %864 = vrot.lane.b32.xlu0 %v862, 64
  %v865 = vpop.permute.xlu0 %864
  %v867 = vadd.f32 %v861, %v865
  %v868 = vtanh.pop %v867
  %v869 = vmul.f32 %v860, %v868
  %v871 = vlaneseq
  %v872 = vshrl.u32 %v871, 7
  %v873 = vsub.s32 0, %v872
  %v874 = vrot.slane %v185, %v873
  %877 = vrot.lane.b32.xlu0 %v323, 64
  %v878 = vpop.permute.xlu0 %877
  %v880 = vmul.f32 %v874, %v878
  %v882 = vlaneseq
  %v883 = vshrl.u32 %v882, 7
  %v884 = vsub.s32 0, %v883
  %v885 = vrot.slane %v186, %v884
  %888 = vrot.lane.b32.xlu0 %v869, 64
  %v889 = vpop.permute.xlu0 %888
  %v891 = vmul.f32 %v885, %v889
  %v892 = vadd.f32 %v880, %v891
  %894 = vrot.lane.b32.xlu0 %v401, 64
  %v895 = vpop.permute.xlu0 %894
  %v897 = vmul.f32 %v874, %v895
  %899 = vrot.lane.b32.xlu0 %v791, 64
  %v900 = vpop.permute.xlu0 %899
  %v902 = vmul.f32 %v885, %v900
  %v903 = vadd.f32 %v897, %v902
  %905 = vrot.lane.b32.xlu0 %v479, 64
  %v906 = vpop.permute.xlu0 %905
  %v908 = vmul.f32 %v874, %v906
  %910 = vrot.lane.b32.xlu0 %v713, 64
  %v911 = vpop.permute.xlu0 %910
  %v913 = vmul.f32 %v885, %v911
  %v914 = vadd.f32 %v908, %v913
  %916 = vrot.lane.b32.xlu0 %v557, 64
  %v917 = vpop.permute.xlu0 %916
  %v919 = vmul.f32 %v874, %v917
  %921 = vrot.lane.b32.xlu0 %v635, 64
  %v922 = vpop.permute.xlu0 %921
  %v924 = vmul.f32 %v885, %v922
  %v925 = vadd.f32 %v919, %v924
  %v926 = vmul.f32 %v874, %v922
  %v927 = vmul.f32 %v885, %v917
  %v928 = vadd.f32 %v926, %v927
  %v929 = vmul.f32 %v874, %v911
  %v930 = vmul.f32 %v885, %v906
  %v931 = vadd.f32 %v929, %v930
  %v932 = vmul.f32 %v874, %v900
  %v933 = vmul.f32 %v885, %v895
  %v934 = vadd.f32 %v932, %v933
  %v935 = vmul.f32 %v874, %v889
  %v936 = vmul.f32 %v885, %v878
  %v937 = vadd.f32 %v935, %v936
  %v938 = vpack.c.bf16 %v903, %v892
  %v939 = vpack.c.bf16 %v925, %v914
  %v940 = vpack.c.bf16 %v931, %v928
  %v941 = vpack.c.bf16 %v937, %v934
  %v942 = vld [vmem:[%s6] sm:$0xf]
  %v943 = vld [vmem:[%s6 + $0x4] sm:$0xf]
  %v944 = vld [vmem:[%s6 + $0x8] sm:$0xf]
  %v945 = vld [vmem:[%s6 + $0xc] sm:$0xf]
  %v946 = vld [vmem:[%s6 + $0x10] sm:$0xf]
  %v947 = vld [vmem:[%s6 + $0x14] sm:$0xf]
  %v948 = vld [vmem:[%s6 + $0x18] sm:$0xf]
  %v949 = vld [vmem:[%s6 + $0x1c] sm:$0xf]
  %v950 = vld [vmem:[%s7] sm:$0x1]
  %v952 = vlaneseq
  %v953 = vshrl.u32 %v952, 7
  %v954 = vsub.s32 0, %v953
  %v955 = vrot.slane %v950, %v954
  %v965 = vunpack.c.l.b16 %v942
  %v966 = vunpack.c.l.b16 %v943
  %v967 = vunpack.c.l.b16 %v944
  %v968 = vunpack.c.l.b16 %v945
  %v969 = vunpack.c.l.b16 %v946
  %v970 = vunpack.c.l.b16 %v947
  %v971 = vunpack.c.l.b16 %v948
  %v972 = vunpack.c.l.b16 %v949
  %v973 = vpack.c.b16 %v966, %v965
  %v974 = vpack.c.b16 %v968, %v967
  %v975 = vpack.c.b16 %v970, %v969
  %v976 = vpack.c.b16 %v972, %v971
  %v982 = vsel %vm255, %v938, 0
  %v985 = vsel %vm255, %v939, 0
  %v988 = vsel %vm255, %v940, 0
  %v991 = vsel %vm255, %v941, 0
  %993 = vmatprep.subr.bf16.mxu0 0
  %994 = vmatpush1.bf16.msra.mxu0 %v973
  %995 = vmatprep.subr.bf16.mxu0 0
  %996 = vmatpush1.bf16.msra.mxu0 %v974
  %997 = vmatprep.subr.bf16.mxu0 0
  %998 = vmatpush1.bf16.msra.mxu0 %v975
  %999 = vmatprep.subr.bf16.mxu0 0
  %1000 = vmatpush1.bf16.msra.mxu0 %v976
  %1001 = vmatprep.subr.bf16.mxu0 0
  %1002 = vmatpush1.bf16.msra.mxu0 0
  %1003 = vmatprep.subr.bf16.mxu0 0
  %1004 = vmatpush1.bf16.msra.mxu0 0
  %1005 = vmatprep.subr.bf16.mxu0 0
  %1006 = vmatpush1.bf16.msra.mxu0 0
  %1007 = vmatprep.subr.bf16.mxu0 0
  %1008 = vmatpush1.bf16.msra.mxu0 0
  %1009 = vmatprep.subr.bf16.mxu0 0
  %1010 = vmatpush1.bf16.msra.mxu0 0
  %1011 = vmatprep.subr.bf16.mxu0 0
  %1012 = vmatpush1.bf16.msra.mxu0 0
  %1013 = vmatprep.subr.bf16.mxu0 0
  %1014 = vmatpush1.bf16.msra.mxu0 0
  %1015 = vmatprep.subr.bf16.mxu0 0
  %1016 = vmatpush1.bf16.msra.mxu0 0
  %1017 = vmatprep.subr.bf16.mxu0 0
  %1018 = vmatpush1.bf16.msra.mxu0 0
  %1019 = vmatprep.subr.bf16.mxu0 0
  %1020 = vmatpush1.bf16.msra.mxu0 0
  %1021 = vmatprep.subr.bf16.mxu0 0
  %1022 = vmatpush1.bf16.msra.mxu0 0
  %1023 = vmatprep.subr.bf16.mxu0 0
  %1024 = vmatpush1.bf16.msra.mxu0 0
  %1025 = vmatprep.mubr.bf16.mxu0 0
  %1026 = vmatmul.mubr.bf16.gmra.mrb[0].mxu0 %v982
  %v1027 = vpop.f32.mrb[0].mxu0
  %v1028 = vadd.f32 %v955, %v1027
  %v1029 = vpop.f32.mrb[0].mxu0
  %v1030 = vpop.f32.mrb[0].mxu0
  %v1031 = vadd.f32 %v955, %v1030
  %v1032 = vpop.f32.mrb[0].mxu0
  %1033 = vmatprep.mubr.bf16.mxu0 0
  %1034 = vmatmul.mubr.bf16.gmra.mrb[0].mxu0 %v985
  %v1035 = vpop.f32.mrb[0].mxu0
  %v1036 = vadd.f32 %v955, %v1035
  %v1037 = vpop.f32.mrb[0].mxu0
  %v1038 = vpop.f32.mrb[0].mxu0
  %v1039 = vadd.f32 %v955, %v1038
  %v1040 = vpop.f32.mrb[0].mxu0
  %1041 = vmatprep.mubr.bf16.mxu0 0
  %1042 = vmatmul.mubr.bf16.gmra.mrb[0].mxu0 %v988
  %v1043 = vpop.f32.mrb[0].mxu0
  %v1044 = vadd.f32 %v955, %v1043
  %v1045 = vpop.f32.mrb[0].mxu0
  %v1046 = vpop.f32.mrb[0].mxu0
  %v1047 = vadd.f32 %v955, %v1046
  %v1048 = vpop.f32.mrb[0].mxu0
  %1049 = vmatprep.mubr.bf16.mxu0 0
  %1050 = vmatmul.mubr.bf16.gmra.mrb[0].mxu0 %v991
  %v1051 = vpop.f32.mrb[0].mxu0
  %v1052 = vadd.f32 %v955, %v1051
  %v1053 = vpop.f32.mrb[0].mxu0
  %v1054 = vpop.f32.mrb[0].mxu0
  %v1055 = vadd.f32 %v955, %v1054
  %v1056 = vpop.f32.mrb[0].mxu0
  %1057 = vdwg.mxu0
  %v1058 = vld [vmem:[%s8] sm:$0x1]
  %v1060 = vlaneseq
  %v1061 = vshrl.u32 %v1060, 7
  %v1062 = vsub.s32 0, %v1061
  %v1063 = vrot.slane %v1058, %v1062
  %v1065 = vld [vmem:[%s9] sm:$0xf]
  %v1066 = vld [vmem:[%s9 + $0x4] sm:$0xf]
  %v1067 = vld [vmem:[%s9 + $0x8] sm:$0xf]
  %v1068 = vld [vmem:[%s9 + $0xc] sm:$0xf]
  %v1069 = vld [vmem:[%s10] sm:$0x1]
  %v1071 = vlaneseq
  %v1072 = vshrl.u32 %v1071, 7
  %v1073 = vsub.s32 0, %v1072
  %v1074 = vrot.slane %v1069, %v1073
  %v1076 = vpack.c.bf16 0.0, 0.0
  %v1081 = vunpack.c.l.b16 %v1065
  %v1082 = vunpack.c.l.b16 %v1066
  %v1083 = vunpack.c.l.b16 %v1067
  %v1084 = vunpack.c.l.b16 %v1068
  %v1085 = vpack.c.b16 %v1082, %v1081
  %v1086 = vpack.c.b16 %v1084, %v1083
  %v1090 = vsel %vm89, %v1076, 0
  %1092 = vmatprep.subr.bf16.mxu0 0
  %1093 = vmatpush1.bf16.msra.mxu0 %v1085
  %1094 = vmatprep.subr.bf16.mxu0 0
  %1095 = vmatpush1.bf16.msra.mxu0 %v1086
  %1096 = vmatprep.subr.bf16.mxu0 0
  %1097 = vmatpush1.bf16.msra.mxu0 0
  %1098 = vmatprep.subr.bf16.mxu0 0
  %1099 = vmatpush1.bf16.msra.mxu0 0
  %1100 = vmatprep.subr.bf16.mxu0 0
  %1101 = vmatpush1.bf16.msra.mxu0 0
  %1102 = vmatprep.subr.bf16.mxu0 0
  %1103 = vmatpush1.bf16.msra.mxu0 0
  %1104 = vmatprep.subr.bf16.mxu0 0
  %1105 = vmatpush1.bf16.msra.mxu0 0
  %1106 = vmatprep.subr.bf16.mxu0 0
  %1107 = vmatpush1.bf16.msra.mxu0 0
  %1108 = vmatprep.subr.bf16.mxu0 0
  %1109 = vmatpush1.bf16.msra.mxu0 0
  %1110 = vmatprep.subr.bf16.mxu0 0
  %1111 = vmatpush1.bf16.msra.mxu0 0
  %1112 = vmatprep.subr.bf16.mxu0 0
  %1113 = vmatpush1.bf16.msra.mxu0 0
  %1114 = vmatprep.subr.bf16.mxu0 0
  %1115 = vmatpush1.bf16.msra.mxu0 0
  %1116 = vmatprep.subr.bf16.mxu0 0
  %1117 = vmatpush1.bf16.msra.mxu0 0
  %1118 = vmatprep.subr.bf16.mxu0 0
  %1119 = vmatpush1.bf16.msra.mxu0 0
  %1120 = vmatprep.subr.bf16.mxu0 0
  %1121 = vmatpush1.bf16.msra.mxu0 0
  %1122 = vmatprep.subr.bf16.mxu0 0
  %1123 = vmatpush1.bf16.msra.mxu0 0
  %1124 = vmatprep.mubr.bf16.mxu0 0
  %1125 = vmatmul.mubr.bf16.gmra.mrb[0].mxu0 %v1090
  %v1126 = vpop.f32.mrb[0].mxu0
  %v1127 = vadd.f32 0.0, %v1126
  %v1128 = vpop.f32.mrb[0].mxu0
  %v1129 = vpop.f32.mrb[0].mxu0
  %v1130 = vpop.f32.mrb[0].mxu0
  %1131 = vdwg.mxu0
  %1133 = vrot.lane.b32.xlu0 %v1127, 32
  %v1134 = vpop.permute.xlu0 %1133
  %v1136 = vadd.f32 %v1028, %v1134
  %vm1137 = vcmp.ge.f32.partialorder %v1136, 0.0
  %v1138 = vsel %vm1137, 1, 0
  %v1139 = vcvt.s32.f32 %v1138
  %1141 = vset.pattern.permute.xlu0 48
  %1142 = vperm.xlu0 %1141, %v1139
  %v1143 = vpop.permute.xlu0 %1142
  %v1145 = vmul.f32 %v1143, %v1063
  %v1146 = vadd.f32 %v1028, %v1145
  %v1147 = vadd.f32 %v1127, %v1074
  %v1148 = vadd.f32 %v1146, %v1147
  %v1149 = vxor.u32 %v1148, 2147483648
  %v1150 = vmul.f32 %v1149, 1.442695
  %v1151 = vpow.pop %v1150
  %v1152 = vadd.f32 %v1151, 1.0
  %v1153 = vrcp.pop %v1152
  %v1154 = vmul.f32 1.0, %v1153
  %v1155 = vmul.f32 %v1154, 0.0
  %v1156 = vsub.f32 1.0, %v1154
  %1158 = vrot.lane.b32.xlu0 %v1146, 112
  %v1159 = vpop.permute.xlu0 %1158
  %v1161 = vmul.f32 %v1156, %v1159
  %v1162 = vadd.f32 %v1155, %v1161
  %v1163 = vadd.f32 %v1146, 0.0
  %1165 = vrot.lane.b32.xlu0 %v1163, 96
  %v1166 = vpop.permute.xlu0 %1165
  %v1168 = vmul.f32 %v1156, %v1166
  %v1169 = vadd.f32 %v1155, %v1168
  %v1170 = vtanh.pop %v1169
  %1172 = vrot.lane.b32.xlu0 %v1162, 16
  %v1173 = vpop.permute.xlu0 %1172
  %vm1175 = vcmask 130048
  %v1176 = vsel %vm1175, %v1170, %v1173
  %v1177 = vpack.c.bf16 %v1176, %v1176
  %v1179 = vsel %vm89, %v1177, 0
  %1181 = vmatprep.subr.bf16.mxu0 0
  %1182 = vmatpush1.bf16.msra.mxu0 %v1085
  %1183 = vmatprep.subr.bf16.mxu0 0
  %1184 = vmatpush1.bf16.msra.mxu0 %v1086
  %1185 = vmatprep.subr.bf16.mxu0 0
  %1186 = vmatpush1.bf16.msra.mxu0 0
  %1187 = vmatprep.subr.bf16.mxu0 0
  %1188 = vmatpush1.bf16.msra.mxu0 0
  %1189 = vmatprep.subr.bf16.mxu0 0
  %1190 = vmatpush1.bf16.msra.mxu0 0
  %1191 = vmatprep.subr.bf16.mxu0 0
  %1192 = vmatpush1.bf16.msra.mxu0 0
  %1193 = vmatprep.subr.bf16.mxu0 0
  %1194 = vmatpush1.bf16.msra.mxu0 0
  %1195 = vmatprep.subr.bf16.mxu0 0
  %1196 = vmatpush1.bf16.msra.mxu0 0
  %1197 = vmatprep.subr.bf16.mxu0 0
  %1198 = vmatpush1.bf16.msra.mxu0 0
  %1199 = vmatprep.subr.bf16.mxu0 0
  %1200 = vmatpush1.bf16.msra.mxu0 0
  %1201 = vmatprep.subr.bf16.mxu0 0
  %1202 = vmatpush1.bf16.msra.mxu0 0
  %1203 = vmatprep.subr.bf16.mxu0 0
  %1204 = vmatpush1.bf16.msra.mxu0 0
  %1205 = vmatprep.subr.bf16.mxu0 0
  %1206 = vmatpush1.bf16.msra.mxu0 0
  %1207 = vmatprep.subr.bf16.mxu0 0
  %1208 = vmatpush1.bf16.msra.mxu0 0
  %1209 = vmatprep.subr.bf16.mxu0 0
  %1210 = vmatpush1.bf16.msra.mxu0 0
  %1211 = vmatprep.subr.bf16.mxu0 0
  %1212 = vmatpush1.bf16.msra.mxu0 0
  %1213 = vmatprep.mubr.bf16.mxu0 0
  %1214 = vmatmul.mubr.bf16.gmra.mrb[0].mxu0 %v1179
  %v1215 = vpop.f32.mrb[0].mxu0
  %v1216 = vadd.f32 0.0, %v1215
  %v1217 = vpop.f32.mrb[0].mxu0
  %v1218 = vpop.f32.mrb[0].mxu0
  %v1219 = vpop.f32.mrb[0].mxu0
  %1220 = vdwg.mxu0
  %1222 = vrot.lane.b32.xlu0 %v1216, 32
  %v1223 = vpop.permute.xlu0 %1222
  %v1225 = vadd.f32 %v1031, %v1223
  %vm1226 = vcmp.ge.f32.partialorder %v1225, 0.0
  %v1227 = vsel %vm1226, 1, 0
  %v1228 = vcvt.s32.f32 %v1227
  %1230 = vset.pattern.permute.xlu0 48
  %1231 = vperm.xlu0 %1230, %v1228
  %v1232 = vpop.permute.xlu0 %1231
  %v1234 = vmul.f32 %v1232, %v1063
  %v1235 = vadd.f32 %v1031, %v1234
  %v1236 = vadd.f32 %v1216, %v1074
  %v1237 = vadd.f32 %v1235, %v1236
  %v1238 = vxor.u32 %v1237, 2147483648
  %v1239 = vmul.f32 %v1238, 1.442695
  %v1240 = vpow.pop %v1239
  %v1241 = vadd.f32 %v1240, 1.0
  %v1242 = vrcp.pop %v1241
  %v1243 = vmul.f32 1.0, %v1242
  %v1244 = vmul.f32 %v1243, %v1162
  %v1245 = vsub.f32 1.0, %v1243
  %1247 = vrot.lane.b32.xlu0 %v1235, 112
  %v1248 = vpop.permute.xlu0 %1247
  %v1250 = vmul.f32 %v1245, %v1248
  %v1251 = vadd.f32 %v1244, %v1250
  %v1252 = vmul.f32 %v1243, %v1169
  %1253 = vrot.lane.b32.xlu0 %v1235, 96
  %v1254 = vpop.permute.xlu0 %1253
  %v1256 = vadd.f32 %v1162, %v1254
  %v1257 = vmul.f32 %v1245, %v1256
  %v1258 = vadd.f32 %v1252, %v1257
  %v1259 = vtanh.pop %v1258
  %1261 = vrot.lane.b32.xlu0 %v1251, 16
  %v1262 = vpop.permute.xlu0 %1261
  %v1264 = vsel %vm1175, %v1259, %v1262
  %v1265 = vpack.c.bf16 %v1264, %v1264
  %v1267 = vsel %vm89, %v1265, 0
  %1269 = vmatprep.subr.bf16.mxu0 0
  %1270 = vmatpush1.bf16.msra.mxu0 %v1085
  %1271 = vmatprep.subr.bf16.mxu0 0
  %1272 = vmatpush1.bf16.msra.mxu0 %v1086
  %1273 = vmatprep.subr.bf16.mxu0 0
  %1274 = vmatpush1.bf16.msra.mxu0 0
  %1275 = vmatprep.subr.bf16.mxu0 0
  %1276 = vmatpush1.bf16.msra.mxu0 0
  %1277 = vmatprep.subr.bf16.mxu0 0
  %1278 = vmatpush1.bf16.msra.mxu0 0
  %1279 = vmatprep.subr.bf16.mxu0 0
  %1280 = vmatpush1.bf16.msra.mxu0 0
  %1281 = vmatprep.subr.bf16.mxu0 0
  %1282 = vmatpush1.bf16.msra.mxu0 0
  %1283 = vmatprep.subr.bf16.mxu0 0
  %1284 = vmatpush1.bf16.msra.mxu0 0
  %1285 = vmatprep.subr.bf16.mxu0 0
  %1286 = vmatpush1.bf16.msra.mxu0 0
  %1287 = vmatprep.subr.bf16.mxu0 0
  %1288 = vmatpush1.bf16.msra.mxu0 0
  %1289 = vmatprep.subr.bf16.mxu0 0
  %1290 = vmatpush1.bf16.msra.mxu0 0
  %1291 = vmatprep.subr.bf16.mxu0 0
  %1292 = vmatpush1.bf16.msra.mxu0 0
  %1293 = vmatprep.subr.bf16.mxu0 0
  %1294 = vmatpush1.bf16.msra.mxu0 0
  %1295 = vmatprep.subr.bf16.mxu0 0
  %1296 = vmatpush1.bf16.msra.mxu0 0
  %1297 = vmatprep.subr.bf16.mxu0 0
  %1298 = vmatpush1.bf16.msra.mxu0 0
  %1299 = vmatprep.subr.bf16.mxu0 0
  %1300 = vmatpush1.bf16.msra.mxu0 0
  %1301 = vmatprep.mubr.bf16.mxu0 0
  %1302 = vmatmul.mubr.bf16.gmra.mrb[0].mxu0 %v1267
  %v1303 = vpop.f32.mrb[0].mxu0
  %v1304 = vadd.f32 0.0, %v1303
  %v1305 = vpop.f32.mrb[0].mxu0
  %v1306 = vpop.f32.mrb[0].mxu0
  %v1307 = vpop.f32.mrb[0].mxu0
  %1308 = vdwg.mxu0
  %1310 = vrot.lane.b32.xlu0 %v1304, 32
  %v1311 = vpop.permute.xlu0 %1310
  %v1313 = vadd.f32 %v1036, %v1311
  %vm1314 = vcmp.ge.f32.partialorder %v1313, 0.0
  %v1315 = vsel %vm1314, 1, 0
  %v1316 = vcvt.s32.f32 %v1315
  %1318 = vset.pattern.permute.xlu0 48
  %1319 = vperm.xlu0 %1318, %v1316
  %v1320 = vpop.permute.xlu0 %1319
  %v1322 = vmul.f32 %v1320, %v1063
  %v1323 = vadd.f32 %v1036, %v1322
  %v1324 = vadd.f32 %v1304, %v1074
  %v1325 = vadd.f32 %v1323, %v1324
  %v1326 = vxor.u32 %v1325, 2147483648
  %v1327 = vmul.f32 %v1326, 1.442695
  %v1328 = vpow.pop %v1327
  %v1329 = vadd.f32 %v1328, 1.0
  %v1330 = vrcp.pop %v1329
  %v1331 = vmul.f32 1.0, %v1330
  %v1332 = vmul.f32 %v1331, %v1251
  %v1333 = vsub.f32 1.0, %v1331
  %1335 = vrot.lane.b32.xlu0 %v1323, 112
  %v1336 = vpop.permute.xlu0 %1335
  %v1338 = vmul.f32 %v1333, %v1336
  %v1339 = vadd.f32 %v1332, %v1338
  %v1340 = vmul.f32 %v1331, %v1258
  %1341 = vrot.lane.b32.xlu0 %v1323, 96
  %v1342 = vpop.permute.xlu0 %1341
  %v1344 = vadd.f32 %v1251, %v1342
  %v1345 = vmul.f32 %v1333, %v1344
  %v1346 = vadd.f32 %v1340, %v1345
  %v1347 = vtanh.pop %v1346
  %1349 = vrot.lane.b32.xlu0 %v1339, 16
  %v1350 = vpop.permute.xlu0 %1349
  %v1352 = vsel %vm1175, %v1347, %v1350
  %v1353 = vpack.c.bf16 %v1352, %v1352
  %v1355 = vsel %vm89, %v1353, 0
  %1357 = vmatprep.subr.bf16.mxu0 0
  %1358 = vmatpush1.bf16.msra.mxu0 %v1085
  %1359 = vmatprep.subr.bf16.mxu0 0
  %1360 = vmatpush1.bf16.msra.mxu0 %v1086
  %1361 = vmatprep.subr.bf16.mxu0 0
  %1362 = vmatpush1.bf16.msra.mxu0 0
  %1363 = vmatprep.subr.bf16.mxu0 0
  %1364 = vmatpush1.bf16.msra.mxu0 0
  %1365 = vmatprep.subr.bf16.mxu0 0
  %1366 = vmatpush1.bf16.msra.mxu0 0
  %1367 = vmatprep.subr.bf16.mxu0 0
  %1368 = vmatpush1.bf16.msra.mxu0 0
  %1369 = vmatprep.subr.bf16.mxu0 0
  %1370 = vmatpush1.bf16.msra.mxu0 0
  %1371 = vmatprep.subr.bf16.mxu0 0
  %1372 = vmatpush1.bf16.msra.mxu0 0
  %1373 = vmatprep.subr.bf16.mxu0 0
  %1374 = vmatpush1.bf16.msra.mxu0 0
  %1375 = vmatprep.subr.bf16.mxu0 0
  %1376 = vmatpush1.bf16.msra.mxu0 0
  %1377 = vmatprep.subr.bf16.mxu0 0
  %1378 = vmatpush1.bf16.msra.mxu0 0
  %1379 = vmatprep.subr.bf16.mxu0 0
  %1380 = vmatpush1.bf16.msra.mxu0 0
  %1381 = vmatprep.subr.bf16.mxu0 0
  %1382 = vmatpush1.bf16.msra.mxu0 0
  %1383 = vmatprep.subr.bf16.mxu0 0
  %1384 = vmatpush1.bf16.msra.mxu0 0
  %1385 = vmatprep.subr.bf16.mxu0 0
  %1386 = vmatpush1.bf16.msra.mxu0 0
  %1387 = vmatprep.subr.bf16.mxu0 0
  %1388 = vmatpush1.bf16.msra.mxu0 0
  %1389 = vmatprep.mubr.bf16.mxu0 0
  %1390 = vmatmul.mubr.bf16.gmra.mrb[0].mxu0 %v1355
  %v1391 = vpop.f32.mrb[0].mxu0
  %v1392 = vadd.f32 0.0, %v1391
  %v1393 = vpop.f32.mrb[0].mxu0
  %v1394 = vpop.f32.mrb[0].mxu0
  %v1395 = vpop.f32.mrb[0].mxu0
  %1396 = vdwg.mxu0
  %1398 = vrot.lane.b32.xlu0 %v1392, 32
  %v1399 = vpop.permute.xlu0 %1398
  %v1401 = vadd.f32 %v1039, %v1399
  %vm1402 = vcmp.ge.f32.partialorder %v1401, 0.0
  %v1403 = vsel %vm1402, 1, 0
  %v1404 = vcvt.s32.f32 %v1403
  %1406 = vset.pattern.permute.xlu0 48
  %1407 = vperm.xlu0 %1406, %v1404
  %v1408 = vpop.permute.xlu0 %1407
  %v1410 = vmul.f32 %v1408, %v1063
  %v1411 = vadd.f32 %v1039, %v1410
  %v1412 = vadd.f32 %v1392, %v1074
  %v1413 = vadd.f32 %v1411, %v1412
  %v1414 = vxor.u32 %v1413, 2147483648
  %v1415 = vmul.f32 %v1414, 1.442695
  %v1416 = vpow.pop %v1415
  %v1417 = vadd.f32 %v1416, 1.0
  %v1418 = vrcp.pop %v1417
  %v1419 = vmul.f32 1.0, %v1418
  %v1420 = vmul.f32 %v1419, %v1339
  %v1421 = vsub.f32 1.0, %v1419
  %1423 = vrot.lane.b32.xlu0 %v1411, 112
  %v1424 = vpop.permute.xlu0 %1423
  %v1426 = vmul.f32 %v1421, %v1424
  %v1427 = vadd.f32 %v1420, %v1426
  %v1428 = vmul.f32 %v1419, %v1346
  %1429 = vrot.lane.b32.xlu0 %v1411, 96
  %v1430 = vpop.permute.xlu0 %1429
  %v1432 = vadd.f32 %v1339, %v1430
  %v1433 = vmul.f32 %v1421, %v1432
  %v1434 = vadd.f32 %v1428, %v1433
  %v1435 = vtanh.pop %v1434
  %1437 = vrot.lane.b32.xlu0 %v1427, 16
  %v1438 = vpop.permute.xlu0 %1437
  %v1440 = vsel %vm1175, %v1435, %v1438
  %v1441 = vpack.c.bf16 %v1440, %v1440
  %v1443 = vsel %vm89, %v1441, 0
  %1445 = vmatprep.subr.bf16.mxu0 0
  %1446 = vmatpush1.bf16.msra.mxu0 %v1085
  %1447 = vmatprep.subr.bf16.mxu0 0
  %1448 = vmatpush1.bf16.msra.mxu0 %v1086
  %1449 = vmatprep.subr.bf16.mxu0 0
  %1450 = vmatpush1.bf16.msra.mxu0 0
  %1451 = vmatprep.subr.bf16.mxu0 0
  %1452 = vmatpush1.bf16.msra.mxu0 0
  %1453 = vmatprep.subr.bf16.mxu0 0
  %1454 = vmatpush1.bf16.msra.mxu0 0
  %1455 = vmatprep.subr.bf16.mxu0 0
  %1456 = vmatpush1.bf16.msra.mxu0 0
  %1457 = vmatprep.subr.bf16.mxu0 0
  %1458 = vmatpush1.bf16.msra.mxu0 0
  %1459 = vmatprep.subr.bf16.mxu0 0
  %1460 = vmatpush1.bf16.msra.mxu0 0
  %1461 = vmatprep.subr.bf16.mxu0 0
  %1462 = vmatpush1.bf16.msra.mxu0 0
  %1463 = vmatprep.subr.bf16.mxu0 0
  %1464 = vmatpush1.bf16.msra.mxu0 0
  %1465 = vmatprep.subr.bf16.mxu0 0
  %1466 = vmatpush1.bf16.msra.mxu0 0
  %1467 = vmatprep.subr.bf16.mxu0 0
  %1468 = vmatpush1.bf16.msra.mxu0 0
  %1469 = vmatprep.subr.bf16.mxu0 0
  %1470 = vmatpush1.bf16.msra.mxu0 0
  %1471 = vmatprep.subr.bf16.mxu0 0
  %1472 = vmatpush1.bf16.msra.mxu0 0
  %1473 = vmatprep.subr.bf16.mxu0 0
  %1474 = vmatpush1.bf16.msra.mxu0 0
  %1475 = vmatprep.subr.bf16.mxu0 0
  %1476 = vmatpush1.bf16.msra.mxu0 0
  %1477 = vmatprep.mubr.bf16.mxu0 0
  %1478 = vmatmul.mubr.bf16.gmra.mrb[0].mxu0 %v1443
  %v1479 = vpop.f32.mrb[0].mxu0
  %v1480 = vadd.f32 0.0, %v1479
  %v1481 = vpop.f32.mrb[0].mxu0
  %v1482 = vpop.f32.mrb[0].mxu0
  %v1483 = vpop.f32.mrb[0].mxu0
  %1484 = vdwg.mxu0
  %1486 = vrot.lane.b32.xlu0 %v1480, 32
  %v1487 = vpop.permute.xlu0 %1486
  %v1489 = vadd.f32 %v1044, %v1487
  %vm1490 = vcmp.ge.f32.partialorder %v1489, 0.0
  %v1491 = vsel %vm1490, 1, 0
  %v1492 = vcvt.s32.f32 %v1491
  %1494 = vset.pattern.permute.xlu0 48
  %1495 = vperm.xlu0 %1494, %v1492
  %v1496 = vpop.permute.xlu0 %1495
  %v1498 = vmul.f32 %v1496, %v1063
  %v1499 = vadd.f32 %v1044, %v1498
  %v1500 = vadd.f32 %v1480, %v1074
  %v1501 = vadd.f32 %v1499, %v1500
  %v1502 = vxor.u32 %v1501, 2147483648
  %v1503 = vmul.f32 %v1502, 1.442695
  %v1504 = vpow.pop %v1503
  %v1505 = vadd.f32 %v1504, 1.0
  %v1506 = vrcp.pop %v1505
  %v1507 = vmul.f32 1.0, %v1506
  %v1508 = vmul.f32 %v1507, %v1427
  %v1509 = vsub.f32 1.0, %v1507
  %1511 = vrot.lane.b32.xlu0 %v1499, 112
  %v1512 = vpop.permute.xlu0 %1511
  %v1514 = vmul.f32 %v1509, %v1512
  %v1515 = vadd.f32 %v1508, %v1514
  %v1516 = vmul.f32 %v1507, %v1434
  %1517 = vrot.lane.b32.xlu0 %v1499, 96
  %v1518 = vpop.permute.xlu0 %1517
  %v1520 = vadd.f32 %v1427, %v1518
  %v1521 = vmul.f32 %v1509, %v1520
  %v1522 = vadd.f32 %v1516, %v1521
  %v1523 = vtanh.pop %v1522
  %1525 = vrot.lane.b32.xlu0 %v1515, 16
  %v1526 = vpop.permute.xlu0 %1525
  %v1528 = vsel %vm1175, %v1523, %v1526
  %v1529 = vpack.c.bf16 %v1528, %v1528
  %v1531 = vsel %vm89, %v1529, 0
  %1533 = vmatprep.subr.bf16.mxu0 0
  %1534 = vmatpush1.bf16.msra.mxu0 %v1085
  %1535 = vmatprep.subr.bf16.mxu0 0
  %1536 = vmatpush1.bf16.msra.mxu0 %v1086
  %1537 = vmatprep.subr.bf16.mxu0 0
  %1538 = vmatpush1.bf16.msra.mxu0 0
  %1539 = vmatprep.subr.bf16.mxu0 0
  %1540 = vmatpush1.bf16.msra.mxu0 0
  %1541 = vmatprep.subr.bf16.mxu0 0
  %1542 = vmatpush1.bf16.msra.mxu0 0
  %1543 = vmatprep.subr.bf16.mxu0 0
  %1544 = vmatpush1.bf16.msra.mxu0 0
  %1545 = vmatprep.subr.bf16.mxu0 0
  %1546 = vmatpush1.bf16.msra.mxu0 0
  %1547 = vmatprep.subr.bf16.mxu0 0
  %1548 = vmatpush1.bf16.msra.mxu0 0
  %1549 = vmatprep.subr.bf16.mxu0 0
  %1550 = vmatpush1.bf16.msra.mxu0 0
  %1551 = vmatprep.subr.bf16.mxu0 0
  %1552 = vmatpush1.bf16.msra.mxu0 0
  %1553 = vmatprep.subr.bf16.mxu0 0
  %1554 = vmatpush1.bf16.msra.mxu0 0
  %1555 = vmatprep.subr.bf16.mxu0 0
  %1556 = vmatpush1.bf16.msra.mxu0 0
  %1557 = vmatprep.subr.bf16.mxu0 0
  %1558 = vmatpush1.bf16.msra.mxu0 0
  %1559 = vmatprep.subr.bf16.mxu0 0
  %1560 = vmatpush1.bf16.msra.mxu0 0
  %1561 = vmatprep.subr.bf16.mxu0 0
  %1562 = vmatpush1.bf16.msra.mxu0 0
  %1563 = vmatprep.subr.bf16.mxu0 0
  %1564 = vmatpush1.bf16.msra.mxu0 0
  %1565 = vmatprep.mubr.bf16.mxu0 0
  %1566 = vmatmul.mubr.bf16.gmra.mrb[0].mxu0 %v1531
  %v1567 = vpop.f32.mrb[0].mxu0
  %v1568 = vadd.f32 0.0, %v1567
  %v1569 = vpop.f32.mrb[0].mxu0
  %v1570 = vpop.f32.mrb[0].mxu0
  %v1571 = vpop.f32.mrb[0].mxu0
  %1572 = vdwg.mxu0
  %1574 = vrot.lane.b32.xlu0 %v1568, 32
  %v1575 = vpop.permute.xlu0 %1574
  %v1577 = vadd.f32 %v1047, %v1575
  %vm1578 = vcmp.ge.f32.partialorder %v1577, 0.0
  %v1579 = vsel %vm1578, 1, 0
  %v1580 = vcvt.s32.f32 %v1579
  %1582 = vset.pattern.permute.xlu0 48
  %1583 = vperm.xlu0 %1582, %v1580
  %v1584 = vpop.permute.xlu0 %1583
  %v1586 = vmul.f32 %v1584, %v1063
  %v1587 = vadd.f32 %v1047, %v1586
  %v1588 = vadd.f32 %v1568, %v1074
  %v1589 = vadd.f32 %v1587, %v1588
  %v1590 = vxor.u32 %v1589, 2147483648
  %v1591 = vmul.f32 %v1590, 1.442695
  %v1592 = vpow.pop %v1591
  %v1593 = vadd.f32 %v1592, 1.0
  %v1594 = vrcp.pop %v1593
  %v1595 = vmul.f32 1.0, %v1594
  %v1596 = vmul.f32 %v1595, %v1515
  %v1597 = vsub.f32 1.0, %v1595
  %1599 = vrot.lane.b32.xlu0 %v1587, 112
  %v1600 = vpop.permute.xlu0 %1599
  %v1602 = vmul.f32 %v1597, %v1600
  %v1603 = vadd.f32 %v1596, %v1602
  %v1604 = vmul.f32 %v1595, %v1522
  %1605 = vrot.lane.b32.xlu0 %v1587, 96
  %v1606 = vpop.permute.xlu0 %1605
  %v1608 = vadd.f32 %v1515, %v1606
  %v1609 = vmul.f32 %v1597, %v1608
  %v1610 = vadd.f32 %v1604, %v1609
  %v1611 = vtanh.pop %v1610
  %1613 = vrot.lane.b32.xlu0 %v1603, 16
  %v1614 = vpop.permute.xlu0 %1613
  %v1616 = vsel %vm1175, %v1611, %v1614
  %v1617 = vpack.c.bf16 %v1616, %v1616
  %v1619 = vsel %vm89, %v1617, 0
  %1621 = vmatprep.subr.bf16.mxu0 0
  %1622 = vmatpush1.bf16.msra.mxu0 %v1085
  %1623 = vmatprep.subr.bf16.mxu0 0
  %1624 = vmatpush1.bf16.msra.mxu0 %v1086
  %1625 = vmatprep.subr.bf16.mxu0 0
  %1626 = vmatpush1.bf16.msra.mxu0 0
  %1627 = vmatprep.subr.bf16.mxu0 0
  %1628 = vmatpush1.bf16.msra.mxu0 0
  %1629 = vmatprep.subr.bf16.mxu0 0
  %1630 = vmatpush1.bf16.msra.mxu0 0
  %1631 = vmatprep.subr.bf16.mxu0 0
  %1632 = vmatpush1.bf16.msra.mxu0 0
  %1633 = vmatprep.subr.bf16.mxu0 0
  %1634 = vmatpush1.bf16.msra.mxu0 0
  %1635 = vmatprep.subr.bf16.mxu0 0
  %1636 = vmatpush1.bf16.msra.mxu0 0
  %1637 = vmatprep.subr.bf16.mxu0 0
  %1638 = vmatpush1.bf16.msra.mxu0 0
  %1639 = vmatprep.subr.bf16.mxu0 0
  %1640 = vmatpush1.bf16.msra.mxu0 0
  %1641 = vmatprep.subr.bf16.mxu0 0
  %1642 = vmatpush1.bf16.msra.mxu0 0
  %1643 = vmatprep.subr.bf16.mxu0 0
  %1644 = vmatpush1.bf16.msra.mxu0 0
  %1645 = vmatprep.subr.bf16.mxu0 0
  %1646 = vmatpush1.bf16.msra.mxu0 0
  %1647 = vmatprep.subr.bf16.mxu0 0
  %1648 = vmatpush1.bf16.msra.mxu0 0
  %1649 = vmatprep.subr.bf16.mxu0 0
  %1650 = vmatpush1.bf16.msra.mxu0 0
  %1651 = vmatprep.subr.bf16.mxu0 0
  %1652 = vmatpush1.bf16.msra.mxu0 0
  %1653 = vmatprep.mubr.bf16.mxu0 0
  %1654 = vmatmul.mubr.bf16.gmra.mrb[0].mxu0 %v1619
  %v1655 = vpop.f32.mrb[0].mxu0
  %v1656 = vadd.f32 0.0, %v1655
  %v1657 = vpop.f32.mrb[0].mxu0
  %v1658 = vpop.f32.mrb[0].mxu0
  %v1659 = vpop.f32.mrb[0].mxu0
  %1660 = vdwg.mxu0
  %1662 = vrot.lane.b32.xlu0 %v1656, 32
  %v1663 = vpop.permute.xlu0 %1662
  %v1665 = vadd.f32 %v1052, %v1663
  %vm1666 = vcmp.ge.f32.partialorder %v1665, 0.0
  %v1667 = vsel %vm1666, 1, 0
  %v1668 = vcvt.s32.f32 %v1667
  %1670 = vset.pattern.permute.xlu0 48
  %1671 = vperm.xlu0 %1670, %v1668
  %v1672 = vpop.permute.xlu0 %1671
  %v1674 = vmul.f32 %v1672, %v1063
  %v1675 = vadd.f32 %v1052, %v1674
  %v1676 = vadd.f32 %v1656, %v1074
  %v1677 = vadd.f32 %v1675, %v1676
  %v1678 = vxor.u32 %v1677, 2147483648
  %v1679 = vmul.f32 %v1678, 1.442695
  %v1680 = vpow.pop %v1679
  %v1681 = vadd.f32 %v1680, 1.0
  %v1682 = vrcp.pop %v1681
  %v1683 = vmul.f32 1.0, %v1682
  %v1684 = vmul.f32 %v1683, %v1603
  %v1685 = vsub.f32 1.0, %v1683
  %1687 = vrot.lane.b32.xlu0 %v1675, 112
  %v1688 = vpop.permute.xlu0 %1687
  %v1690 = vmul.f32 %v1685, %v1688
  %v1691 = vadd.f32 %v1684, %v1690
  %v1692 = vmul.f32 %v1683, %v1610
  %1693 = vrot.lane.b32.xlu0 %v1675, 96
  %v1694 = vpop.permute.xlu0 %1693
  %v1696 = vadd.f32 %v1603, %v1694
  %v1697 = vmul.f32 %v1685, %v1696
  %v1698 = vadd.f32 %v1692, %v1697
  %v1699 = vtanh.pop %v1698
  %1701 = vrot.lane.b32.xlu0 %v1691, 16
  %v1702 = vpop.permute.xlu0 %1701
  %v1704 = vsel %vm1175, %v1699, %v1702
  %v1705 = vpack.c.bf16 %v1704, %v1704
  %v1707 = vsel %vm89, %v1705, 0
  %1709 = vmatprep.subr.bf16.mxu0 0
  %1710 = vmatpush1.bf16.msra.mxu0 %v1085
  %1711 = vmatprep.subr.bf16.mxu0 0
  %1712 = vmatpush1.bf16.msra.mxu0 %v1086
  %1713 = vmatprep.subr.bf16.mxu0 0
  %1714 = vmatpush1.bf16.msra.mxu0 0
  %1715 = vmatprep.subr.bf16.mxu0 0
  %1716 = vmatpush1.bf16.msra.mxu0 0
  %1717 = vmatprep.subr.bf16.mxu0 0
  %1718 = vmatpush1.bf16.msra.mxu0 0
  %1719 = vmatprep.subr.bf16.mxu0 0
  %1720 = vmatpush1.bf16.msra.mxu0 0
  %1721 = vmatprep.subr.bf16.mxu0 0
  %1722 = vmatpush1.bf16.msra.mxu0 0
  %1723 = vmatprep.subr.bf16.mxu0 0
  %1724 = vmatpush1.bf16.msra.mxu0 0
  %1725 = vmatprep.subr.bf16.mxu0 0
  %1726 = vmatpush1.bf16.msra.mxu0 0
  %1727 = vmatprep.subr.bf16.mxu0 0
  %1728 = vmatpush1.bf16.msra.mxu0 0
  %1729 = vmatprep.subr.bf16.mxu0 0
  %1730 = vmatpush1.bf16.msra.mxu0 0
  %1731 = vmatprep.subr.bf16.mxu0 0
  %1732 = vmatpush1.bf16.msra.mxu0 0
  %1733 = vmatprep.subr.bf16.mxu0 0
  %1734 = vmatpush1.bf16.msra.mxu0 0
  %1735 = vmatprep.subr.bf16.mxu0 0
  %1736 = vmatpush1.bf16.msra.mxu0 0
  %1737 = vmatprep.subr.bf16.mxu0 0
  %1738 = vmatpush1.bf16.msra.mxu0 0
  %1739 = vmatprep.subr.bf16.mxu0 0
  %1740 = vmatpush1.bf16.msra.mxu0 0
  %1741 = vmatprep.mubr.bf16.mxu0 0
  %1742 = vmatmul.mubr.bf16.gmra.mrb[0].mxu0 %v1707
  %v1743 = vpop.f32.mrb[0].mxu0
  %v1744 = vadd.f32 0.0, %v1743
  %v1745 = vpop.f32.mrb[0].mxu0
  %v1746 = vpop.f32.mrb[0].mxu0
  %v1747 = vpop.f32.mrb[0].mxu0
  %1748 = vdwg.mxu0
  %1750 = vrot.lane.b32.xlu0 %v1744, 32
  %v1751 = vpop.permute.xlu0 %1750
  %v1753 = vadd.f32 %v1055, %v1751
  %vm1754 = vcmp.ge.f32.partialorder %v1753, 0.0
  %v1755 = vsel %vm1754, 1, 0
  %v1756 = vcvt.s32.f32 %v1755
  %1757 = vrot.lane.b32.xlu0 %v1139, 80
  %v1758 = vpop.permute.xlu0 %1757
  %1760 = vrot.lane.b32.xlu0 %v1228, 81
  %v1761 = vpop.permute.xlu0 %1760
  %1763 = vrot.lane.b32.xlu0 %v1316, 82
  %v1764 = vpop.permute.xlu0 %1763
  %1766 = vrot.lane.b32.xlu0 %v1404, 83
  %v1767 = vpop.permute.xlu0 %1766
  %1769 = vrot.lane.b32.xlu0 %v1492, 84
  %v1770 = vpop.permute.xlu0 %1769
  %1772 = vrot.lane.b32.xlu0 %v1580, 85
  %v1773 = vpop.permute.xlu0 %1772
  %1775 = vrot.lane.b32.xlu0 %v1668, 86
  %v1776 = vpop.permute.xlu0 %1775
  %1779 = vrot.lane.b32.xlu0 %v1756, 87
  %v1780 = vpop.permute.xlu0 %1779
  %vm1782 = vcmask 7168
  %v1783 = vsel %vm1782, %v1758, %v1761
  %vm1784 = vcmask 15360
  %v1785 = vsel %vm1784, %v1783, %v1764
  %vm1786 = vcmask 23552
  %v1787 = vsel %vm1786, %v1785, %v1767
  %vm1788 = vcmask 31744
  %v1789 = vsel %vm1788, %v1787, %v1770
  %vm1790 = vcmask 39936
  %v1791 = vsel %vm1790, %v1789, %v1773
  %vm1792 = vcmask 48128
  %v1793 = vsel %vm1792, %v1791, %v1776
  %vm1794 = vcmask 56320
  %v1795 = vsel %vm1794, %v1793, %v1780
  %vm1796 = vcmask 64512
  %1797 = vst.msk [vmem:[%s11] sm:$0xff] %vm1796, %v1795
  %1799 = vrot.lane.b32.xlu0 %v1136, 80
  %v1800 = vpop.permute.xlu0 %1799
  %1803 = vrot.lane.b32.xlu0 %v1225, 81
  %v1804 = vpop.permute.xlu0 %1803
  %1807 = vrot.lane.b32.xlu0 %v1313, 82
  %v1808 = vpop.permute.xlu0 %1807
  %1811 = vrot.lane.b32.xlu0 %v1401, 83
  %v1812 = vpop.permute.xlu0 %1811
  %1815 = vrot.lane.b32.xlu0 %v1489, 84
  %v1816 = vpop.permute.xlu0 %1815
  %1819 = vrot.lane.b32.xlu0 %v1577, 85
  %v1820 = vpop.permute.xlu0 %1819
  %1823 = vrot.lane.b32.xlu0 %v1665, 86
  %v1824 = vpop.permute.xlu0 %1823
  %1827 = vrot.lane.b32.xlu0 %v1753, 87
  %v1828 = vpop.permute.xlu0 %1827
  %v1830 = vsel %vm1782, %v1800, %v1804
  %v1831 = vsel %vm1784, %v1830, %v1808
  %v1832 = vsel %vm1786, %v1831, %v1812
  %v1833 = vsel %vm1788, %v1832, %v1816
  %v1834 = vsel %vm1790, %v1833, %v1820
  %v1835 = vsel %vm1792, %v1834, %v1824
  %v1836 = vsel %vm1794, %v1835, %v1828
  %1837 = vst.msk [vmem:[%s12] sm:$0xff] %vm1796, %v1836
  // Predicated region
  $region46: #{dependent_generator_forward.1} parent=0 // pred_check
    _
  $region47: #{dependent_generator_forward.1} parent=0 // pred_check_branch
    %1839 = sbr.rel (0) target = $region49
  $region48: #{dependent_generator_forward.1} parent=0 // pred_region
    _
  $region49: #{dependent_generator_forward.1} parent=0 // pred_fallthru
    _
  // Predicated region
  $region50: #{dependent_generator_forward.1} parent=0 // pred_check
    _
  $region51: #{dependent_generator_forward.1} parent=0 // pred_check_branch
    %1841 = sbr.rel (0) target = $region53
  $region52: #{dependent_generator_forward.1} parent=0 // pred_region
    _
  $region53: #{dependent_generator_forward.1} parent=0 // pred_fallthru
    _
  // Predicated region
  $region54: #{dependent_generator_forward.1} parent=0 // pred_check
    _
  $region55: #{dependent_generator_forward.1} parent=0 // pred_check_branch
    %1843 = sbr.rel (0) target = $region57
  $region56: #{dependent_generator_forward.1} parent=0 // pred_region
    _
  $region57: #{dependent_generator_forward.1} parent=0 // pred_fallthru
    _
  // Predicated region
  $region58: #{dependent_generator_forward.1} parent=0 // pred_check
    _
  $region59: #{dependent_generator_forward.1} parent=0 // pred_check_branch
    %1845 = sbr.rel (0) target = $region61
  $region60: #{dependent_generator_forward.1} parent=0 // pred_region
    _
  $region61: #{dependent_generator_forward.1} parent=0 // pred_fallthru
    _

</llo_original>
